<compile_context>
chip_gen: v7x
topology: tpu7x:2x2x1
jax: 0.10.0
libtpu: 0.0.40
codegen_flags: <defaults>
</compile_context>

<pallas_src>
import jax
import jax.numpy as jnp
from jax.experimental import pallas as pl
from jax.experimental.pallas import tpu as pltpu

LANE = 128
SUBLANE = 8


def _round_up(x, m):
    return ((x + m - 1) // m) * m


def _tpu_hw_info():
    """Returns (physical VMEM bytes per core, TPU generation int or None)."""
    gen = None
    try:
        kind = jax.devices()[0].device_kind.lower()
        for g in (7, 6, 5, 4, 3, 2):
            if f"v{g}" in kind:
                gen = g
                break
    except Exception:
        pass
    vmem = None
    try:
        vmem = int(pltpu.get_tpu_info().vmem_capacity_bytes)
    except Exception:
        pass
    if vmem is None:
        # Conservative fallback: v7x-sized VMEM unless we know it's an older gen.
        vmem = (128 if (gen is not None and gen < 7) else 64) * 1024 * 1024
    return vmem, gen


# ---------------------------------------------------------------------------
# Kernel
# ---------------------------------------------------------------------------
def _make_autoencoder_kernel(n_enc: int, n_dec: int, act_dtype):
    """Fused MLP kernel for a fixed layer structure.

    Ref order:
      x_ref,
      (W, b) * n_enc,        # encoder (each Linear followed by ReLU)
      (W, b) * n_dec,        # decoder (ReLU except last layer -> Sigmoid)
      out_ref, latent_ref
    All refs are lane-padded to multiples of 128 on the feature axis.
    """
    n_params = 2 * (n_enc + n_dec)

    def kernel(*refs):
        x_ref = refs[0]
        param_refs = refs[1:1 + n_params]
        out_ref = refs[1 + n_params]
        latent_ref = refs[2 + n_params]

        h = x_ref[...]

        p = 0
        # ----- encoder: Linear + ReLU for every layer (incl. latent layer) ----
        for li in range(n_enc):
            w = param_refs[2 * p][...]
            b = param_refs[2 * p + 1][...].astype(jnp.float32)   # biases are f32
            # Cast activations to the weight dtype for the MXU; accumulate f32.
            h = jnp.dot(h.astype(w.dtype), w,
                        preferred_element_type=jnp.float32) + b
            h = jnp.maximum(h, 0.0)
            if li == n_enc - 1:
                # Store latent from the f32 value (before any bf16 downcast).
                latent_ref[...] = h.astype(latent_ref.dtype)
            h = h.astype(act_dtype)
            p += 1

        # ----- decoder: Linear + ReLU, last layer Linear + Sigmoid ------------
        for i in range(n_dec):
            w = param_refs[2 * p][...]
            b = param_refs[2 * p + 1][...].astype(jnp.float32)
            h = jnp.dot(h.astype(w.dtype), w,
                        preferred_element_type=jnp.float32) + b
            if i < n_dec - 1:
                h = jnp.maximum(h, 0.0).astype(act_dtype)
            else:
                h = jax.nn.sigmoid(h)                            # f32 EUP math
            p += 1
        out_ref[...] = h.astype(out_ref.dtype)

    return kernel


# ---------------------------------------------------------------------------
# Wrapper
# ---------------------------------------------------------------------------
def denoising_autoencoder_forward(x, params, n_enc, *,
                                  param_dtype=jnp.bfloat16,
                                  max_tile_b=1024):
    """Fused autoencoder forward pass.

    x:        (B, input_dim) float32
    params:   list of (W, b); W is (in, out) == PyTorch weight.T, b is (out,)
    n_enc:    number of encoder Linear layers (including the latent layer)
    returns:  (output, latent) -- matching the PyTorch forward
    """
    B, input_dim = x.shape
    n_dec = len(params) - n_enc
    assert n_enc >= 1 and n_dec >= 1
    latent_dim = params[n_enc - 1][0].shape[1]

    vmem_phys, gen = _tpu_hw_info()
    param_dtype = jnp.dtype(param_dtype)
    out_dtype = x.dtype
    out_itemsize = jnp.dtype(out_dtype).itemsize
    # bf16 inter-layer activations only where the VPU is natively bf16 (v6e+);
    # on v5e / unknown chips keep f32 between layers (cast-before-dot only).
    bf16_acts = (param_dtype == jnp.dtype(jnp.bfloat16)
                 and gen is not None and gen >= 6)
    act_dtype = jnp.bfloat16 if bf16_acts else jnp.float32

    # ---- lane-pad every feature dim to a multiple of 128 ---------------------
    dims = [input_dim] + [w.shape[1] for (w, _) in params]
    pdims = [_round_up(d, LANE) for d in dims]

    # ---- VMEM budget (generation-aware) ---------------------------------------
    weight_bytes = 0
    for li in range(len(params)):
        pin, pout = pdims[li], pdims[li + 1]
        weight_bytes += pin * pout * param_dtype.itemsize + pout * 4  # f32 bias

    budget = int(vmem_phys * 0.75)               # headroom under physical VMEM
    # Per-batch-row VMEM of the pipelined streams (x / out / latent are
    # double-buffered) plus headroom for in-kernel activation temporaries.
    per_row = (2 * pdims[0] * out_itemsize                # x tile (in)
               + 2 * pdims[0] * out_itemsize              # reconstruction tile
               + 2 * pdims[n_enc] * out_itemsize          # latent tile
               + 3 * max(pdims) * 4)                      # activation temps
    avail = budget - weight_bytes - (2 << 20)             # 2 MiB compiler slack
    # TODO(synk): if the weights alone ever exceed the VMEM budget, tile the
    # largest layer over its output dim with an inner pltpu.emit_pipeline
    # instead of the resident-all-weights design.
    assert avail >= per_row * SUBLANE, (
        "parameters do not fit in VMEM for the resident-weight design")
    tile_cap = max(SUBLANE, (avail // per_row) // SUBLANE * SUBLANE)

    # ---- batch tiling ---------------------------------------------------------
    B_sub = _round_up(B, SUBLANE)
    tile_limit = max(SUBLANE, min(max_tile_b, tile_cap))
    # v7x has 2 TensorCores: never emit grid=(1,) so the "parallel" batch axis
    # can shard across cores. (Extra grid step is ~free on 1-TC chips.)
    min_tiles = 2 if (gen is None or gen >= 7) else 1
    if B_sub <= tile_limit:
        n_tiles = min_tiles if B_sub >= min_tiles * SUBLANE else 1
        tile_b = _round_up(-(-B_sub // n_tiles), SUBLANE)
    else:
        tile_b = tile_limit
    Bp = _round_up(B, tile_b)
    grid = (Bp // tile_b,)

    # ---- pad x / params (skipped when already aligned) ------------------------
    x_p = x if (Bp == B and pdims[0] == input_dim) else jnp.pad(
        x, ((0, Bp - B), (0, pdims[0] - input_dim)))

    flat_params = []
    for li, (w, b) in enumerate(params):
        d_in, d_out = w.shape
        pin, pout = pdims[li], pdims[li + 1]
        w_p = w if (pin == d_in and pout == d_out) else jnp.pad(
            w, ((0, pin - d_in), (0, pout - d_out)))
        w_p = w_p.astype(param_dtype)
        b_row = jnp.asarray(b, jnp.float32).reshape(1, -1)        # biases stay f32
        b_p = b_row if pout == d_out else jnp.pad(
            b_row, ((0, 0), (0, pout - d_out)))
        flat_params.extend([w_p, b_p])

    p_in, p_lat = pdims[0], pdims[n_enc]
    out_specs = [
        pl.BlockSpec((tile_b, p_in), lambda i: (i, 0)),
        pl.BlockSpec((tile_b, p_lat), lambda i: (i, 0)),
    ]
    out_shape = [
        jax.ShapeDtypeStruct((Bp, p_in), out_dtype),
        jax.ShapeDtypeStruct((Bp, p_lat), out_dtype),
    ]

    # ---- advisory cost estimate for XLA scheduling ----------------------------
    flops = 2 * Bp * sum(pdims[i] * pdims[i + 1] for i in range(len(params)))
    transcendentals = Bp * p_in                          # sigmoid on final layer
    bytes_accessed = (Bp * p_in * out_itemsize           # x
                      + weight_bytes                     # params (read once)
                      + Bp * p_in * out_itemsize         # reconstruction
                      + Bp * p_lat * out_itemsize)       # latent
    cost = pl.CostEstimate(flops=int(flops),
                           transcendentals=int(transcendentals),
                           bytes_accessed=int(bytes_accessed))

    kernel = _make_autoencoder_kernel(n_enc, n_dec, act_dtype)

    def _make_in_specs(single_buffer_weights):
        specs = [pl.BlockSpec((tile_b, pdims[0]), lambda i: (i, 0))]
        for li in range(len(params)):
            pin, pout = pdims[li], pdims[li + 1]
            if single_buffer_weights:
                # Grid-invariant params: fetched once, single VMEM buffer.
                specs.append(pl.BlockSpec((pin, pout), lambda i: (0, 0),
                                          pipeline_mode=pl.Buffered(1)))
                specs.append(pl.BlockSpec((1, pout), lambda i: (0, 0),
                                          pipeline_mode=pl.Buffered(1)))
            else:
                specs.append(pl.BlockSpec((pin, pout), lambda i: (0, 0)))
                specs.append(pl.BlockSpec((1, pout), lambda i: (0, 0)))
        return specs

    def _run(single_buffer_weights):
        fn = pl.pallas_call(
            kernel,
            out_shape=out_shape,
            grid_spec=pltpu.PrefetchScalarGridSpec(
                num_scalar_prefetch=0,
                grid=grid,
                in_specs=_make_in_specs(single_buffer_weights),
                out_specs=out_specs,
            ),
            compiler_params=pltpu.CompilerParams(
                dimension_semantics=("parallel",),
                vmem_limit_bytes=int(budget),
            ),
            cost_estimate=cost,
        )
        return fn(x_p, *flat_params)

    try:
        out_p, lat_p = _run(True)
    except Exception:
        # Safety fallback: default double-buffered weights (costs VMEM but
        # always lowers) if pipeline_mode=Buffered(1) is unavailable.
        out_p, lat_p = _run(False)

    # Strip batch/lane padding only when padding was actually added.
    out = out_p if (Bp == B and p_in == input_dim) else out_p[:B, :input_dim]
    lat = lat_p if (Bp == B and p_lat == latent_dim) else lat_p[:B, :latent_dim]
    return out, lat


# ---------------------------------------------------------------------------
# Parameter construction (PyTorch-Linear-style uniform init)
# ---------------------------------------------------------------------------
def init_params(key, input_dim, encoder_layers, latent_dim, decoder_layers):
    dims = [input_dim, *encoder_layers, latent_dim, *decoder_layers, input_dim]
    params = []
    for d_in, d_out in zip(dims[:-1], dims[1:]):
        key, kw, kb = jax.random.split(key, 3)
        bound = 1.0 / jnp.sqrt(d_in)
        w = jax.random.uniform(kw, (d_in, d_out), jnp.float32, -bound, bound)  # (in,out)
        b = jax.random.uniform(kb, (d_out,), jnp.float32, -bound, bound)
        params.append((w, b))
    n_enc = len(encoder_layers) + 1  # hidden encoder layers + latent layer
    return params, n_enc


def reference_forward(x, params, n_enc):
    """Pure-JAX reference mirroring the PyTorch module (eval mode)."""
    h = x
    for (w, b) in params[:n_enc]:
        h = jnp.maximum(h @ w + b.reshape(1, -1), 0.0)
    latent = h
    dec = params[n_enc:]
    for i, (w, b) in enumerate(dec):
        h = h @ w + b.reshape(1, -1)
        h = jax.nn.sigmoid(h) if i == len(dec) - 1 else jnp.maximum(h, 0.0)
    return h, latent


# ---------------------------------------------------------------------------
if __name__ == "__main__":
    # Small, forward-implied shapes.  NOTE: at these sizes the kernel is
    # launch/DMA-latency bound; the production lever is batching multiple
    # forward calls into one pallas_call, not micro-tuning the body.
    input_dim = 32
    encoder_layers = (64,)
    latent_dim = 16
    decoder_layers = (64,)
    noise_std = 0.1
    batch = 32
    training = False  # eval-mode forward (deterministic). Set True to add noise.

    key = jax.random.PRNGKey(0)
    key, kx, kn = jax.random.split(key, 3)

    x = jax.random.uniform(kx, (batch, input_dim), jnp.float32)
    params, n_enc = init_params(key, input_dim, encoder_layers, latent_dim,
                                decoder_layers)

    if training:
        # torch.randn_like(x) * noise_std, applied in plain-JAX glue.
        x_noisy = x + jax.random.normal(kn, x.shape, x.dtype) * noise_std
    else:
        x_noisy = x

    out_ref, lat_ref = reference_forward(x_noisy, params, n_enc)

    # ---- f32 weights: exact-tolerance correctness check ----------------------
    output, latent = denoising_autoencoder_forward(
        x_noisy, params, n_enc, param_dtype=jnp.float32)
    jax.block_until_ready((output, latent))
    assert output.shape == (batch, input_dim)
    assert latent.shape == (batch, latent_dim)
    assert jnp.allclose(output, out_ref, atol=1e-5, rtol=1e-5)
    assert jnp.allclose(latent, lat_ref, atol=1e-5, rtol=1e-5)

    # ---- default path (bf16 weights, bf16 acts on v6e+): loose check ---------
    out_bf, lat_bf = denoising_autoencoder_forward(x_noisy, params, n_enc)
    jax.block_until_ready((out_bf, lat_bf))
    assert out_bf.shape == (batch, input_dim)
    assert lat_bf.shape == (batch, latent_dim)
    assert jnp.allclose(out_bf, out_ref, atol=5e-2, rtol=5e-2)
    assert jnp.allclose(lat_bf, lat_ref, atol=7e-2, rtol=7e-2)

    print("KERNEL_OK")
</pallas_src>

<mosaic_0001>
module attributes {stable_mosaic.version = 11 : i64} {
  func.func @kernel(%arg0: i32, %arg1: memref<16x128xf32, #tpu.memory_space<vmem>>, %arg2: memref<128x128xf32, #tpu.memory_space<vmem>>, %arg3: memref<1x128xf32, #tpu.memory_space<vmem>>, %arg4: memref<128x128xf32, #tpu.memory_space<vmem>>, %arg5: memref<1x128xf32, #tpu.memory_space<vmem>>, %arg6: memref<128x128xf32, #tpu.memory_space<vmem>>, %arg7: memref<1x128xf32, #tpu.memory_space<vmem>>, %arg8: memref<128x128xf32, #tpu.memory_space<vmem>>, %arg9: memref<1x128xf32, #tpu.memory_space<vmem>>, %arg10: memref<16x128xf32, #tpu.memory_space<vmem>>, %arg11: memref<16x128xf32, #tpu.memory_space<vmem>>) attributes {dimension_semantics = [#tpu.dimension_semantics<parallel>], iteration_bounds = array<i64: 2>, scalar_prefetch = 0 : i64, scratch_operands = 0 : i64, tpu.core_type = #tpu.core_type<tc>, window_params = [{transform_indices = @transform_0, window_bounds = array<i64: 16, 128>}, {pipeline_mode = #tpu.pipeline_mode<synchronous>, transform_indices = @transform_1, window_bounds = array<i64: 128, 128>}, {pipeline_mode = #tpu.pipeline_mode<synchronous>, transform_indices = @transform_2, window_bounds = array<i64: 1, 128>}, {pipeline_mode = #tpu.pipeline_mode<synchronous>, transform_indices = @transform_3, window_bounds = array<i64: 128, 128>}, {pipeline_mode = #tpu.pipeline_mode<synchronous>, transform_indices = @transform_4, window_bounds = array<i64: 1, 128>}, {pipeline_mode = #tpu.pipeline_mode<synchronous>, transform_indices = @transform_5, window_bounds = array<i64: 128, 128>}, {pipeline_mode = #tpu.pipeline_mode<synchronous>, transform_indices = @transform_6, window_bounds = array<i64: 1, 128>}, {pipeline_mode = #tpu.pipeline_mode<synchronous>, transform_indices = @transform_7, window_bounds = array<i64: 128, 128>}, {pipeline_mode = #tpu.pipeline_mode<synchronous>, transform_indices = @transform_8, window_bounds = array<i64: 1, 128>}, {transform_indices = @transform_9, window_bounds = array<i64: 16, 128>}, {transform_indices = @transform_10, window_bounds = array<i64: 16, 128>}]} {
    %c0 = arith.constant 0 : index
    %c0_0 = arith.constant 0 : index
    %0 = vector.load %arg1[%c0, %c0_0] : memref<16x128xf32, #tpu.memory_space<vmem>>, vector<16x128xf32>
    %c0_1 = arith.constant 0 : index
    %c0_2 = arith.constant 0 : index
    %1 = vector.load %arg2[%c0_1, %c0_2] : memref<128x128xf32, #tpu.memory_space<vmem>>, vector<128x128xf32>
    %c0_3 = arith.constant 0 : index
    %c0_4 = arith.constant 0 : index
    %2 = vector.load %arg3[%c0_3, %c0_4] : memref<1x128xf32, #tpu.memory_space<vmem>>, vector<1x128xf32>
    %cst = arith.constant dense<0.000000e+00> : vector<16x128xf32>
    %3 = tpu.matmul %0, %1, %cst {dimension_numbers = #tpu.dot_dimension_numbers<[1], [0], [0], [1], [0, 0, 1, 1], [], []>} : vector<16x128xf32>, vector<128x128xf32>, vector<16x128xf32> -> vector<16x128xf32>
    %4 = vector.broadcast %2 : vector<1x128xf32> to vector<16x128xf32>
    %5 = arith.addf %3, %4 : vector<16x128xf32>
    %cst_5 = arith.constant 0.000000e+00 : f32
    %6 = vector.broadcast %cst_5 : f32 to vector<16x128xf32>
    %7 = arith.maximumf %5, %6 : vector<16x128xf32>
    %c0_6 = arith.constant 0 : index
    %c0_7 = arith.constant 0 : index
    %8 = vector.load %arg4[%c0_6, %c0_7] : memref<128x128xf32, #tpu.memory_space<vmem>>, vector<128x128xf32>
    %c0_8 = arith.constant 0 : index
    %c0_9 = arith.constant 0 : index
    %9 = vector.load %arg5[%c0_8, %c0_9] : memref<1x128xf32, #tpu.memory_space<vmem>>, vector<1x128xf32>
    %cst_10 = arith.constant dense<0.000000e+00> : vector<16x128xf32>
    %10 = tpu.matmul %7, %8, %cst_10 {dimension_numbers = #tpu.dot_dimension_numbers<[1], [0], [0], [1], [0, 0, 1, 1], [], []>} : vector<16x128xf32>, vector<128x128xf32>, vector<16x128xf32> -> vector<16x128xf32>
    %11 = vector.broadcast %9 : vector<1x128xf32> to vector<16x128xf32>
    %12 = arith.addf %10, %11 : vector<16x128xf32>
    %cst_11 = arith.constant 0.000000e+00 : f32
    %13 = vector.broadcast %cst_11 : f32 to vector<16x128xf32>
    %14 = arith.maximumf %12, %13 : vector<16x128xf32>
    %c0_12 = arith.constant 0 : index
    %c0_13 = arith.constant 0 : index
    %15 = vector.load %arg11[%c0_12, %c0_13] : memref<16x128xf32, #tpu.memory_space<vmem>>, vector<16x128xf32>
    tpu.vector_store %arg11[%c0_12, %c0_13], %14 {strides = array<i32>} : memref<16x128xf32, #tpu.memory_space<vmem>>, vector<16x128xf32>,
    %c0_14 = arith.constant 0 : index
    %c0_15 = arith.constant 0 : index
    %16 = vector.load %arg6[%c0_14, %c0_15] : memref<128x128xf32, #tpu.memory_space<vmem>>, vector<128x128xf32>
    %c0_16 = arith.constant 0 : index
    %c0_17 = arith.constant 0 : index
    %17 = vector.load %arg7[%c0_16, %c0_17] : memref<1x128xf32, #tpu.memory_space<vmem>>, vector<1x128xf32>
    %cst_18 = arith.constant dense<0.000000e+00> : vector<16x128xf32>
    %18 = tpu.matmul %14, %16, %cst_18 {dimension_numbers = #tpu.dot_dimension_numbers<[1], [0], [0], [1], [0, 0, 1, 1], [], []>} : vector<16x128xf32>, vector<128x128xf32>, vector<16x128xf32> -> vector<16x128xf32>
    %19 = vector.broadcast %17 : vector<1x128xf32> to vector<16x128xf32>
    %20 = arith.addf %18, %19 : vector<16x128xf32>
    %cst_19 = arith.constant 0.000000e+00 : f32
    %21 = vector.broadcast %cst_19 : f32 to vector<16x128xf32>
    %22 = arith.maximumf %20, %21 : vector<16x128xf32>
    %c0_20 = arith.constant 0 : index
    %c0_21 = arith.constant 0 : index
    %23 = vector.load %arg8[%c0_20, %c0_21] : memref<128x128xf32, #tpu.memory_space<vmem>>, vector<128x128xf32>
    %c0_22 = arith.constant 0 : index
    %c0_23 = arith.constant 0 : index
    %24 = vector.load %arg9[%c0_22, %c0_23] : memref<1x128xf32, #tpu.memory_space<vmem>>, vector<1x128xf32>
    %cst_24 = arith.constant dense<0.000000e+00> : vector<16x128xf32>
    %25 = tpu.matmul %22, %23, %cst_24 {dimension_numbers = #tpu.dot_dimension_numbers<[1], [0], [0], [1], [0, 0, 1, 1], [], []>} : vector<16x128xf32>, vector<128x128xf32>, vector<16x128xf32> -> vector<16x128xf32>
    %26 = vector.broadcast %24 : vector<1x128xf32> to vector<16x128xf32>
    %27 = arith.addf %25, %26 : vector<16x128xf32>
    %28 = arith.negf %27 : vector<16x128xf32>
    %29 = math.exp %28 : vector<16x128xf32>
    %cst_25 = arith.constant 1.000000e+00 : f32
    %30 = vector.broadcast %cst_25 : f32 to vector<16x128xf32>
    %31 = arith.addf %30, %29 : vector<16x128xf32>
    %32 = arith.divf %30, %31 : vector<16x128xf32>
    %c0_26 = arith.constant 0 : index
    %c0_27 = arith.constant 0 : index
    %33 = vector.load %arg10[%c0_26, %c0_27] : memref<16x128xf32, #tpu.memory_space<vmem>>, vector<16x128xf32>
    tpu.vector_store %arg10[%c0_26, %c0_27], %32 {strides = array<i32>} : memref<16x128xf32, #tpu.memory_space<vmem>>, vector<16x128xf32>,
    return
  }
  func.func @transform_0(%arg0: i32) -> (i32, i32) {
    %c0_i32 = arith.constant 0 : i32
    %c0_i32_0 = arith.constant 0 : i32
    return %arg0, %c0_i32 : i32, i32
  }
  func.func @transform_1(%arg0: i32) -> (i32, i32) {
    %c0_i32 = arith.constant 0 : i32
    %c0_i32_0 = arith.constant 0 : i32
    %c0_i32_1 = arith.constant 0 : i32
    return %c0_i32, %c0_i32_0 : i32, i32
  }
  func.func @transform_2(%arg0: i32) -> (i32, i32) {
    %c0_i32 = arith.constant 0 : i32
    %c0_i32_0 = arith.constant 0 : i32
    %c0_i32_1 = arith.constant 0 : i32
    return %c0_i32, %c0_i32_0 : i32, i32
  }
  func.func @transform_3(%arg0: i32) -> (i32, i32) {
    %c0_i32 = arith.constant 0 : i32
    %c0_i32_0 = arith.constant 0 : i32
    %c0_i32_1 = arith.constant 0 : i32
    return %c0_i32, %c0_i32_0 : i32, i32
  }
  func.func @transform_4(%arg0: i32) -> (i32, i32) {
    %c0_i32 = arith.constant 0 : i32
    %c0_i32_0 = arith.constant 0 : i32
    %c0_i32_1 = arith.constant 0 : i32
    return %c0_i32, %c0_i32_0 : i32, i32
  }
  func.func @transform_5(%arg0: i32) -> (i32, i32) {
    %c0_i32 = arith.constant 0 : i32
    %c0_i32_0 = arith.constant 0 : i32
    %c0_i32_1 = arith.constant 0 : i32
    return %c0_i32, %c0_i32_0 : i32, i32
  }
  func.func @transform_6(%arg0: i32) -> (i32, i32) {
    %c0_i32 = arith.constant 0 : i32
    %c0_i32_0 = arith.constant 0 : i32
    %c0_i32_1 = arith.constant 0 : i32
    return %c0_i32, %c0_i32_0 : i32, i32
  }
  func.func @transform_7(%arg0: i32) -> (i32, i32) {
    %c0_i32 = arith.constant 0 : i32
    %c0_i32_0 = arith.constant 0 : i32
    %c0_i32_1 = arith.constant 0 : i32
    return %c0_i32, %c0_i32_0 : i32, i32
  }
  func.func @transform_8(%arg0: i32) -> (i32, i32) {
    %c0_i32 = arith.constant 0 : i32
    %c0_i32_0 = arith.constant 0 : i32
    %c0_i32_1 = arith.constant 0 : i32
    return %c0_i32, %c0_i32_0 : i32, i32
  }
  func.func @transform_9(%arg0: i32) -> (i32, i32) {
    %c0_i32 = arith.constant 0 : i32
    %c0_i32_0 = arith.constant 0 : i32
    return %arg0, %c0_i32 : i32, i32
  }
  func.func @transform_10(%arg0: i32) -> (i32, i32) {
    %c0_i32 = arith.constant 0 : i32
    %c0_i32_0 = arith.constant 0 : i32
    return %arg0, %c0_i32 : i32, i32
  }
}

module attributes {stable_mosaic.version = 11 : i64} {
  func.func @kernel(%arg0: i32, %arg1: memref<16x128xf32, #tpu.memory_space<vmem>>, %arg2: memref<128x128xf32, #tpu.memory_space<vmem>>, %arg3: memref<1x128xf32, #tpu.memory_space<vmem>>, %arg4: memref<128x128xf32, #tpu.memory_space<vmem>>, %arg5: memref<1x128xf32, #tpu.memory_space<vmem>>, %arg6: memref<128x128xf32, #tpu.memory_space<vmem>>, %arg7: memref<1x128xf32, #tpu.memory_space<vmem>>, %arg8: memref<128x128xf32, #tpu.memory_space<vmem>>, %arg9: memref<1x128xf32, #tpu.memory_space<vmem>>, %arg10: memref<16x128xf32, #tpu.memory_space<vmem>>, %arg11: memref<16x128xf32, #tpu.memory_space<vmem>>) attributes {dimension_semantics = [#tpu.dimension_semantics<parallel>], iteration_bounds = array<i64: 2>, scalar_prefetch = 0 : i64, scratch_operands = 0 : i64, tpu.core_type = #tpu.core_type<tc>, window_params = [{transform_indices = @transform_0, window_bounds = array<i64: 16, 128>}, {pipeline_mode = #tpu.pipeline_mode<synchronous>, transform_indices = @transform_1, window_bounds = array<i64: 128, 128>}, {pipeline_mode = #tpu.pipeline_mode<synchronous>, transform_indices = @transform_2, window_bounds = array<i64: 1, 128>}, {pipeline_mode = #tpu.pipeline_mode<synchronous>, transform_indices = @transform_3, window_bounds = array<i64: 128, 128>}, {pipeline_mode = #tpu.pipeline_mode<synchronous>, transform_indices = @transform_4, window_bounds = array<i64: 1, 128>}, {pipeline_mode = #tpu.pipeline_mode<synchronous>, transform_indices = @transform_5, window_bounds = array<i64: 128, 128>}, {pipeline_mode = #tpu.pipeline_mode<synchronous>, transform_indices = @transform_6, window_bounds = array<i64: 1, 128>}, {pipeline_mode = #tpu.pipeline_mode<synchronous>, transform_indices = @transform_7, window_bounds = array<i64: 128, 128>}, {pipeline_mode = #tpu.pipeline_mode<synchronous>, transform_indices = @transform_8, window_bounds = array<i64: 1, 128>}, {transform_indices = @transform_9, window_bounds = array<i64: 16, 128>}, {transform_indices = @transform_10, window_bounds = array<i64: 16, 128>}]} {
    %c0 = arith.constant 0 : index
    %c0_0 = arith.constant 0 : index
    %0 = vector.load %arg1[%c0, %c0_0] : memref<16x128xf32, #tpu.memory_space<vmem>>, vector<16x128xf32>
    %c0_1 = arith.constant 0 : index
    %c0_2 = arith.constant 0 : index
    %1 = vector.load %arg2[%c0_1, %c0_2] : memref<128x128xf32, #tpu.memory_space<vmem>>, vector<128x128xf32>
    %c0_3 = arith.constant 0 : index
    %c0_4 = arith.constant 0 : index
    %2 = vector.load %arg3[%c0_3, %c0_4] : memref<1x128xf32, #tpu.memory_space<vmem>>, vector<1x128xf32>
    %cst = arith.constant dense<0.000000e+00> : vector<16x128xf32>
    %3 = tpu.matmul %0, %1, %cst {dimension_numbers = #tpu.dot_dimension_numbers<[1], [0], [0], [1], [0, 0, 1, 1], [], []>} : vector<16x128xf32>, vector<128x128xf32>, vector<16x128xf32> -> vector<16x128xf32>
    %4 = vector.broadcast %2 : vector<1x128xf32> to vector<16x128xf32>
    %5 = arith.addf %3, %4 : vector<16x128xf32>
    %cst_5 = arith.constant 0.000000e+00 : f32
    %6 = vector.broadcast %cst_5 : f32 to vector<16x128xf32>
    %7 = arith.maximumf %5, %6 : vector<16x128xf32>
    %c0_6 = arith.constant 0 : index
    %c0_7 = arith.constant 0 : index
    %8 = vector.load %arg4[%c0_6, %c0_7] : memref<128x128xf32, #tpu.memory_space<vmem>>, vector<128x128xf32>
    %c0_8 = arith.constant 0 : index
    %c0_9 = arith.constant 0 : index
    %9 = vector.load %arg5[%c0_8, %c0_9] : memref<1x128xf32, #tpu.memory_space<vmem>>, vector<1x128xf32>
    %cst_10 = arith.constant dense<0.000000e+00> : vector<16x128xf32>
    %10 = tpu.matmul %7, %8, %cst_10 {dimension_numbers = #tpu.dot_dimension_numbers<[1], [0], [0], [1], [0, 0, 1, 1], [], []>} : vector<16x128xf32>, vector<128x128xf32>, vector<16x128xf32> -> vector<16x128xf32>
    %11 = vector.broadcast %9 : vector<1x128xf32> to vector<16x128xf32>
    %12 = arith.addf %10, %11 : vector<16x128xf32>
    %cst_11 = arith.constant 0.000000e+00 : f32
    %13 = vector.broadcast %cst_11 : f32 to vector<16x128xf32>
    %14 = arith.maximumf %12, %13 : vector<16x128xf32>
    %c0_12 = arith.constant 0 : index
    %c0_13 = arith.constant 0 : index
    %15 = vector.load %arg11[%c0_12, %c0_13] : memref<16x128xf32, #tpu.memory_space<vmem>>, vector<16x128xf32>
    tpu.vector_store %arg11[%c0_12, %c0_13], %14 {strides = array<i32>} : memref<16x128xf32, #tpu.memory_space<vmem>>, vector<16x128xf32>,
    %c0_14 = arith.constant 0 : index
    %c0_15 = arith.constant 0 : index
    %16 = vector.load %arg6[%c0_14, %c0_15] : memref<128x128xf32, #tpu.memory_space<vmem>>, vector<128x128xf32>
    %c0_16 = arith.constant 0 : index
    %c0_17 = arith.constant 0 : index
    %17 = vector.load %arg7[%c0_16, %c0_17] : memref<1x128xf32, #tpu.memory_space<vmem>>, vector<1x128xf32>
    %cst_18 = arith.constant dense<0.000000e+00> : vector<16x128xf32>
    %18 = tpu.matmul %14, %16, %cst_18 {dimension_numbers = #tpu.dot_dimension_numbers<[1], [0], [0], [1], [0, 0, 1, 1], [], []>} : vector<16x128xf32>, vector<128x128xf32>, vector<16x128xf32> -> vector<16x128xf32>
    %19 = vector.broadcast %17 : vector<1x128xf32> to vector<16x128xf32>
    %20 = arith.addf %18, %19 : vector<16x128xf32>
    %cst_19 = arith.constant 0.000000e+00 : f32
    %21 = vector.broadcast %cst_19 : f32 to vector<16x128xf32>
    %22 = arith.maximumf %20, %21 : vector<16x128xf32>
    %c0_20 = arith.constant 0 : index
    %c0_21 = arith.constant 0 : index
    %23 = vector.load %arg8[%c0_20, %c0_21] : memref<128x128xf32, #tpu.memory_space<vmem>>, vector<128x128xf32>
    %c0_22 = arith.constant 0 : index
    %c0_23 = arith.constant 0 : index
    %24 = vector.load %arg9[%c0_22, %c0_23] : memref<1x128xf32, #tpu.memory_space<vmem>>, vector<1x128xf32>
    %cst_24 = arith.constant dense<0.000000e+00> : vector<16x128xf32>
    %25 = tpu.matmul %22, %23, %cst_24 {dimension_numbers = #tpu.dot_dimension_numbers<[1], [0], [0], [1], [0, 0, 1, 1], [], []>} : vector<16x128xf32>, vector<128x128xf32>, vector<16x128xf32> -> vector<16x128xf32>
    %26 = vector.broadcast %24 : vector<1x128xf32> to vector<16x128xf32>
    %27 = arith.addf %25, %26 : vector<16x128xf32>
    %28 = arith.negf %27 : vector<16x128xf32>
    %29 = math.exp %28 : vector<16x128xf32>
    %cst_25 = arith.constant 1.000000e+00 : f32
    %30 = vector.broadcast %cst_25 : f32 to vector<16x128xf32>
    %31 = arith.addf %30, %29 : vector<16x128xf32>
    %32 = arith.divf %30, %31 : vector<16x128xf32>
    %c0_26 = arith.constant 0 : index
    %c0_27 = arith.constant 0 : index
    %33 = vector.load %arg10[%c0_26, %c0_27] : memref<16x128xf32, #tpu.memory_space<vmem>>, vector<16x128xf32>
    tpu.vector_store %arg10[%c0_26, %c0_27], %32 {strides = array<i32>} : memref<16x128xf32, #tpu.memory_space<vmem>>, vector<16x128xf32>,
    return
  }
  func.func @transform_0(%arg0: i32) -> (i32, i32) {
    %c0_i32 = arith.constant 0 : i32
    %c0_i32_0 = arith.constant 0 : i32
    return %arg0, %c0_i32 : i32, i32
  }
  func.func @transform_1(%arg0: i32) -> (i32, i32) {
    %c0_i32 = arith.constant 0 : i32
    %c0_i32_0 = arith.constant 0 : i32
    %c0_i32_1 = arith.constant 0 : i32
    return %c0_i32, %c0_i32_0 : i32, i32
  }
  func.func @transform_2(%arg0: i32) -> (i32, i32) {
    %c0_i32 = arith.constant 0 : i32
    %c0_i32_0 = arith.constant 0 : i32
    %c0_i32_1 = arith.constant 0 : i32
    return %c0_i32, %c0_i32_0 : i32, i32
  }
  func.func @transform_3(%arg0: i32) -> (i32, i32) {
    %c0_i32 = arith.constant 0 : i32
    %c0_i32_0 = arith.constant 0 : i32
    %c0_i32_1 = arith.constant 0 : i32
    return %c0_i32, %c0_i32_0 : i32, i32
  }
  func.func @transform_4(%arg0: i32) -> (i32, i32) {
    %c0_i32 = arith.constant 0 : i32
    %c0_i32_0 = arith.constant 0 : i32
    %c0_i32_1 = arith.constant 0 : i32
    return %c0_i32, %c0_i32_0 : i32, i32
  }
  func.func @transform_5(%arg0: i32) -> (i32, i32) {
    %c0_i32 = arith.constant 0 : i32
    %c0_i32_0 = arith.constant 0 : i32
    %c0_i32_1 = arith.constant 0 : i32
    return %c0_i32, %c0_i32_0 : i32, i32
  }
  func.func @transform_6(%arg0: i32) -> (i32, i32) {
    %c0_i32 = arith.constant 0 : i32
    %c0_i32_0 = arith.constant 0 : i32
    %c0_i32_1 = arith.constant 0 : i32
    return %c0_i32, %c0_i32_0 : i32, i32
  }
  func.func @transform_7(%arg0: i32) -> (i32, i32) {
    %c0_i32 = arith.constant 0 : i32
    %c0_i32_0 = arith.constant 0 : i32
    %c0_i32_1 = arith.constant 0 : i32
    return %c0_i32, %c0_i32_0 : i32, i32
  }
  func.func @transform_8(%arg0: i32) -> (i32, i32) {
    %c0_i32 = arith.constant 0 : i32
    %c0_i32_0 = arith.constant 0 : i32
    %c0_i32_1 = arith.constant 0 : i32
    return %c0_i32, %c0_i32_0 : i32, i32
  }
  func.func @transform_9(%arg0: i32) -> (i32, i32) {
    %c0_i32 = arith.constant 0 : i32
    %c0_i32_0 = arith.constant 0 : i32
    return %arg0, %c0_i32 : i32, i32
  }
  func.func @transform_10(%arg0: i32) -> (i32, i32) {
    %c0_i32 = arith.constant 0 : i32
    %c0_i32_0 = arith.constant 0 : i32
    return %arg0, %c0_i32 : i32, i32
  }
}

</mosaic_0001>

<llo_original>
// kernel: tpu_custom_call.1
$region0: #{tpu_custom_call.1}
  #allocation0 [shape = 'u32[]', space=smem, size = 0x4, offset = 0x4, fixed_abs, tag = 'smem constant byte address 0x4 - core index']
  #allocation1 [shape = 'u32[144,128]{1,0:T(1,128)}', space=vmem, size = 0x12000, scoped, tag = 'internal scratch']
  %s0 = inlined_call_operand.hbm [shape: f32[32,128], index: 0, kind: input, shape index: {}]
  %s1 = inlined_call_operand.hbm [shape: f32[128,128], index: 1, kind: input, shape index: {}]
  %s2 = inlined_call_operand.vmem [shape: f32[1,128], index: 2, kind: input, shape index: {}]
  %s3 = inlined_call_operand.hbm [shape: f32[128,128], index: 3, kind: input, shape index: {}]
  %s4 = inlined_call_operand.vmem [shape: f32[1,128], index: 4, kind: input, shape index: {}]
  %s5 = inlined_call_operand.hbm [shape: f32[128,128], index: 5, kind: input, shape index: {}]
  %s6 = inlined_call_operand.vmem [shape: f32[1,128], index: 6, kind: input, shape index: {}]
  %s7 = inlined_call_operand.hbm [shape: f32[128,128], index: 7, kind: input, shape index: {}]
  %s8 = inlined_call_operand.vmem [shape: f32[1,128], index: 8, kind: input, shape index: {}]
  %s9 = inlined_call_operand.hbm [shape: f32[32,128], index: 9, kind: output, shape index: {0}]
  %s10 = inlined_call_operand.hbm [shape: f32[32,128], index: 10, kind: output, shape index: {1}]
  %11 = xla_tuple %s9, %s10
  %s12 = sld [smem:[#allocation0]]
  $region97: #{tpu_custom_call.1} parent=0
    _
  %s14 = ssub.s32 1, %s12
  %s15 = scalar_select 0, %s14, %s12
  $region1: #{tpu_custom_call.1} parent=0
    #allocation2 [shape = 'u8[16384]{0}', space=vmem, size = 0x4000, scoped, tag = 'input window, operand 0']
    #allocation3 [shape = 's32[2]{0}', space=sflag, size = 0x8, scoped, tag = 'scoped memory for tpu_custom_call.1']
    #allocation4 [shape = 's32[2]{0}', space=sflag, size = 0x8, scoped, tag = 'scoped memory for tpu_custom_call.1']
    #allocation5 [shape = 'u8[65536]{0}', space=vmem, size = 0x10000, scoped, tag = 'input window, operand 1, single buffered']
    #allocation6 [shape = 's32[1]{0}', space=sflag, size = 0x4, scoped, tag = 'scoped memory for tpu_custom_call.1']
    #allocation7 [shape = 'u8[65536]{0}', space=vmem, size = 0x10000, scoped, tag = 'input window, operand 3, single buffered']
    #allocation8 [shape = 'u8[65536]{0}', space=vmem, size = 0x10000, scoped, tag = 'input window, operand 5, single buffered']
    #allocation9 [shape = 's32[1]{0}', space=sflag, size = 0x4, scoped, tag = 'scoped memory for tpu_custom_call.1']
    #allocation10 [shape = 'u8[65536]{0}', space=vmem, size = 0x10000, scoped, tag = 'input window, operand 7, single buffered']
    #allocation11 [shape = 'u8[16384]{0}', space=vmem, size = 0x4000, scoped, tag = 'output window, operand 0']
    #allocation12 [shape = 'u8[16384]{0}', space=vmem, size = 0x4000, scoped, tag = 'output window, operand 1']
    #allocation13 [shape = 's32[2]{0}', space=sflag, size = 0x8, scoped, tag = 'scoped memory for tpu_custom_call.1']
    %16 = vsyncpa [#allocation3], 0
    %s17 = scalar_lea.sflag [#allocation3], 1
    %18 = vsyncpa %s17, 0
    %19 = vsyncpa [#allocation6], 0
    %20 = vsyncpa [#allocation9], 0
    %21 = vsyncpa [#allocation4], 0
    %s22 = scalar_lea.sflag [#allocation4], 1
    %23 = vsyncpa %s22, 0
    %24 = vsyncpa [#allocation13], 0
    %s25 = scalar_lea.sflag [#allocation13], 1
    %26 = vsyncpa %s25, 0
    loop: start=0, step=1, limit=4
    $region2: #{tpu_custom_call.1} parent=1 // loop_pre_header
      _
    $region3: #{tpu_custom_call.1} parent=1 // loop_header
      %s28 = sphi 0, %s32
      %p29 = scmp.ge.s32.totalorder %s28, 4
      %s38 = sphi 0, %s40
      %s41 = sphi 0, %s38
      %s42 = sphi 0, %s41
      %s58 = sphi 0, %s42
      %s62 = sphi 0, %s62
      %s64 = sphi 0, %s62
      %s65 = sphi 0, %s64
      %s79 = sphi 0, %s65
      %s83 = sphi 0, %s83
      %s85 = sphi 0, %s83
      %s86 = sphi 0, %s85
      %s100 = sphi 0, %s86
      %s104 = sphi 0, %s104
      %s106 = sphi 0, %s104
      %s107 = sphi 0, %s106
      %s121 = sphi 0, %s107
      %s125 = sphi 0, %s125
      %s127 = sphi 0, %s125
      %s128 = sphi 0, %s127
      %s142 = sphi 0, %s128
      %s146 = sphi 0, %s146
      %s148 = sphi 0, %s146
      %s149 = sphi 0, %s148
      %s163 = sphi 0, %s149
      %s167 = sphi 0, %s167
      %s169 = sphi 0, %s167
      %s170 = sphi 0, %s169
      %s184 = sphi 0, %s170
      %s188 = sphi 0, %s188
      %s190 = sphi 0, %s188
      %s191 = sphi 0, %s190
      %s205 = sphi 0, %s191
      %s209 = sphi 0, %s209
      %s211 = sphi 0, %s209
      %s212 = sphi 0, %s211
      %s226 = sphi 0, %s212
      %s232 = sphi 0, %s234
      %s235 = sphi 0, %s232
      %s236 = sphi 0, %s235
      %s252 = sphi 0, %s236
      %s258 = sphi 0, %s260
      %s261 = sphi 0, %s258
      %s262 = sphi 0, %s261
      %s278 = sphi 0, %s262
    $region4: #{tpu_custom_call.1} parent=1 // loop_header_branch
      %31 = sbr.rel (%p29) target = $region8
    $region5: #{tpu_custom_call.1} parent=1 // loop_body
      %s33 = ssub.s32 %s28, 1
      %s34 = ssub.s32 %s28, 2
      %s35 = sadd.s32 %s28, 1
      %s36 = ssub.s32 %s28, %s35
      %p37 = scmp.eq.s32.totalorder %s36, 0
      %s39 = sadd.s32 %s38, 1
      %s40 = scalar_select %p37, %s38, %s39
      %p43 = pneg %p37
      %p44 = scmp.eq.s32.totalorder %s28, 1
      %p45 = por %p43, %p44
      %p46 = scmp.ne.s32.totalorder %s38, %s41
      %p47 = scmp.eq.s32.totalorder %s28, 0
      %p48 = por %p46, %p47
      %p49 = scmp.ne.s32.totalorder %s38, %s41
      %p50 = scmp.eq.s32.totalorder %s33, 1
      %p51 = por %p49, %p50
      %p52 = scmp.ne.s32.totalorder %s41, %s42
      %p53 = scmp.eq.s32.totalorder %s33, 0
      %p54 = por %p52, %p53
      %p55 = scmp.ne.s32.totalorder %s41, %s42
      %p56 = scmp.eq.s32.totalorder %s34, 1
      %p57 = por %p55, %p56
      %p59 = scmp.ne.s32.totalorder %s42, %s58
      %p60 = scmp.eq.s32.totalorder %s34, 0
      %p61 = por %p59, %p60
      %s63 = sadd.s32 %s62, 1
      %p66 = scmp.eq.s32.totalorder %s28, 1
      %p67 = scmp.ne.s32.totalorder %s62, %s64
      %p68 = scmp.eq.s32.totalorder %s28, 0
      %p69 = por %p67, %p68
      %p70 = scmp.ne.s32.totalorder %s62, %s64
      %p71 = scmp.eq.s32.totalorder %s33, 1
      %p72 = por %p70, %p71
      %p73 = scmp.ne.s32.totalorder %s64, %s65
      %p74 = scmp.eq.s32.totalorder %s33, 0
      %p75 = por %p73, %p74
      %p76 = scmp.ne.s32.totalorder %s64, %s65
      %p77 = scmp.eq.s32.totalorder %s34, 1
      %p78 = por %p76, %p77
      %p80 = scmp.ne.s32.totalorder %s65, %s79
      %p81 = scmp.eq.s32.totalorder %s34, 0
      %p82 = por %p80, %p81
      %s84 = sadd.s32 %s83, 1
      %p87 = scmp.eq.s32.totalorder %s28, 1
      %p88 = scmp.ne.s32.totalorder %s83, %s85
      %p89 = scmp.eq.s32.totalorder %s28, 0
      %p90 = por %p88, %p89
      %p91 = scmp.ne.s32.totalorder %s83, %s85
      %p92 = scmp.eq.s32.totalorder %s33, 1
      %p93 = por %p91, %p92
      %p94 = scmp.ne.s32.totalorder %s85, %s86
      %p95 = scmp.eq.s32.totalorder %s33, 0
      %p96 = por %p94, %p95
      %p97 = scmp.ne.s32.totalorder %s85, %s86
      %p98 = scmp.eq.s32.totalorder %s34, 1
      %p99 = por %p97, %p98
      %p101 = scmp.ne.s32.totalorder %s86, %s100
      %p102 = scmp.eq.s32.totalorder %s34, 0
      %p103 = por %p101, %p102
      %s105 = sadd.s32 %s104, 1
      %p108 = scmp.eq.s32.totalorder %s28, 1
      %p109 = scmp.ne.s32.totalorder %s104, %s106
      %p110 = scmp.eq.s32.totalorder %s28, 0
      %p111 = por %p109, %p110
      %p112 = scmp.ne.s32.totalorder %s104, %s106
      %p113 = scmp.eq.s32.totalorder %s33, 1
      %p114 = por %p112, %p113
      %p115 = scmp.ne.s32.totalorder %s106, %s107
      %p116 = scmp.eq.s32.totalorder %s33, 0
      %p117 = por %p115, %p116
      %p118 = scmp.ne.s32.totalorder %s106, %s107
      %p119 = scmp.eq.s32.totalorder %s34, 1
      %p120 = por %p118, %p119
      %p122 = scmp.ne.s32.totalorder %s107, %s121
      %p123 = scmp.eq.s32.totalorder %s34, 0
      %p124 = por %p122, %p123
      %s126 = sadd.s32 %s125, 1
      %p129 = scmp.eq.s32.totalorder %s28, 1
      %p130 = scmp.ne.s32.totalorder %s125, %s127
      %p131 = scmp.eq.s32.totalorder %s28, 0
      %p132 = por %p130, %p131
      %p133 = scmp.ne.s32.totalorder %s125, %s127
      %p134 = scmp.eq.s32.totalorder %s33, 1
      %p135 = por %p133, %p134
      %p136 = scmp.ne.s32.totalorder %s127, %s128
      %p137 = scmp.eq.s32.totalorder %s33, 0
      %p138 = por %p136, %p137
      %p139 = scmp.ne.s32.totalorder %s127, %s128
      %p140 = scmp.eq.s32.totalorder %s34, 1
      %p141 = por %p139, %p140
      %p143 = scmp.ne.s32.totalorder %s128, %s142
      %p144 = scmp.eq.s32.totalorder %s34, 0
      %p145 = por %p143, %p144
      %s147 = sadd.s32 %s146, 1
      %p150 = scmp.eq.s32.totalorder %s28, 1
      %p151 = scmp.ne.s32.totalorder %s146, %s148
      %p152 = scmp.eq.s32.totalorder %s28, 0
      %p153 = por %p151, %p152
      %p154 = scmp.ne.s32.totalorder %s146, %s148
      %p155 = scmp.eq.s32.totalorder %s33, 1
      %p156 = por %p154, %p155
      %p157 = scmp.ne.s32.totalorder %s148, %s149
      %p158 = scmp.eq.s32.totalorder %s33, 0
      %p159 = por %p157, %p158
      %p160 = scmp.ne.s32.totalorder %s148, %s149
      %p161 = scmp.eq.s32.totalorder %s34, 1
      %p162 = por %p160, %p161
      %p164 = scmp.ne.s32.totalorder %s149, %s163
      %p165 = scmp.eq.s32.totalorder %s34, 0
      %p166 = por %p164, %p165
      %s168 = sadd.s32 %s167, 1
      %p171 = scmp.eq.s32.totalorder %s28, 1
      %p172 = scmp.ne.s32.totalorder %s167, %s169
      %p173 = scmp.eq.s32.totalorder %s28, 0
      %p174 = por %p172, %p173
      %p175 = scmp.ne.s32.totalorder %s167, %s169
      %p176 = scmp.eq.s32.totalorder %s33, 1
      %p177 = por %p175, %p176
      %p178 = scmp.ne.s32.totalorder %s169, %s170
      %p179 = scmp.eq.s32.totalorder %s33, 0
      %p180 = por %p178, %p179
      %p181 = scmp.ne.s32.totalorder %s169, %s170
      %p182 = scmp.eq.s32.totalorder %s34, 1
      %p183 = por %p181, %p182
      %p185 = scmp.ne.s32.totalorder %s170, %s184
      %p186 = scmp.eq.s32.totalorder %s34, 0
      %p187 = por %p185, %p186
      %s189 = sadd.s32 %s188, 1
      %p192 = scmp.eq.s32.totalorder %s28, 1
      %p193 = scmp.ne.s32.totalorder %s188, %s190
      %p194 = scmp.eq.s32.totalorder %s28, 0
      %p195 = por %p193, %p194
      %p196 = scmp.ne.s32.totalorder %s188, %s190
      %p197 = scmp.eq.s32.totalorder %s33, 1
      %p198 = por %p196, %p197
      %p199 = scmp.ne.s32.totalorder %s190, %s191
      %p200 = scmp.eq.s32.totalorder %s33, 0
      %p201 = por %p199, %p200
      %p202 = scmp.ne.s32.totalorder %s190, %s191
      %p203 = scmp.eq.s32.totalorder %s34, 1
      %p204 = por %p202, %p203
      %p206 = scmp.ne.s32.totalorder %s191, %s205
      %p207 = scmp.eq.s32.totalorder %s34, 0
      %p208 = por %p206, %p207
      %s210 = sadd.s32 %s209, 1
      %p213 = scmp.eq.s32.totalorder %s28, 1
      %p214 = scmp.ne.s32.totalorder %s209, %s211
      %p215 = scmp.eq.s32.totalorder %s28, 0
      %p216 = por %p214, %p215
      %p217 = scmp.ne.s32.totalorder %s209, %s211
      %p218 = scmp.eq.s32.totalorder %s33, 1
      %p219 = por %p217, %p218
      %p220 = scmp.ne.s32.totalorder %s211, %s212
      %p221 = scmp.eq.s32.totalorder %s33, 0
      %p222 = por %p220, %p221
      %p223 = scmp.ne.s32.totalorder %s211, %s212
      %p224 = scmp.eq.s32.totalorder %s34, 1
      %p225 = por %p223, %p224
      %p227 = scmp.ne.s32.totalorder %s212, %s226
      %p228 = scmp.eq.s32.totalorder %s34, 0
      %p229 = por %p227, %p228
      %s230 = ssub.s32 %s28, %s35
      %p231 = scmp.eq.s32.totalorder %s230, 0
      %s233 = sadd.s32 %s232, 1
      %s234 = scalar_select %p231, %s232, %s233
      %p237 = pneg %p231
      %p238 = scmp.eq.s32.totalorder %s28, 1
      %p239 = por %p237, %p238
      %p240 = scmp.ne.s32.totalorder %s232, %s235
      %p241 = scmp.eq.s32.totalorder %s28, 0
      %p242 = por %p240, %p241
      %p243 = scmp.ne.s32.totalorder %s232, %s235
      %p244 = scmp.eq.s32.totalorder %s33, 1
      %p245 = por %p243, %p244
      %p246 = scmp.ne.s32.totalorder %s235, %s236
      %p247 = scmp.eq.s32.totalorder %s33, 0
      %p248 = por %p246, %p247
      %p249 = scmp.ne.s32.totalorder %s235, %s236
      %p250 = scmp.eq.s32.totalorder %s34, 1
      %p251 = por %p249, %p250
      %p253 = scmp.ne.s32.totalorder %s236, %s252
      %p254 = scmp.eq.s32.totalorder %s34, 0
      %p255 = por %p253, %p254
      %s256 = ssub.s32 %s28, %s35
      %p257 = scmp.eq.s32.totalorder %s256, 0
      %s259 = sadd.s32 %s258, 1
      %s260 = scalar_select %p257, %s258, %s259
      %p263 = pneg %p257
      %p264 = scmp.eq.s32.totalorder %s28, 1
      %p265 = por %p263, %p264
      %p266 = scmp.ne.s32.totalorder %s258, %s261
      %p267 = scmp.eq.s32.totalorder %s28, 0
      %p268 = por %p266, %p267
      %p269 = scmp.ne.s32.totalorder %s258, %s261
      %p270 = scmp.eq.s32.totalorder %s33, 1
      %p271 = por %p269, %p270
      %p272 = scmp.ne.s32.totalorder %s261, %s262
      %p273 = scmp.eq.s32.totalorder %s33, 0
      %p274 = por %p272, %p273
      %p275 = scmp.ne.s32.totalorder %s261, %s262
      %p276 = scmp.eq.s32.totalorder %s34, 1
      %p277 = por %p275, %p276
      %p279 = scmp.ne.s32.totalorder %s262, %s278
      %p280 = scmp.eq.s32.totalorder %s34, 0
      %p281 = por %p279, %p280
      %p282 = scmp.le.s32.totalorder 1, %s28
      %p283 = scmp.lt.s32.totalorder %s28, 3
      %p284 = pnand %p282, %p283
      %p285 = pneg %p284
      // Predicated region
      $region9: #{tpu_custom_call.1} parent=5 // pred_check
        _
      $region10: #{tpu_custom_call.1} parent=5 // pred_check_branch
        %287 = sbr.rel (%p284) target = $region12
      $region11: #{tpu_custom_call.1} parent=5 // pred_region
        %s288 = ssub.s32 %s28, 1
        // Predicated region
        $region13: #{tpu_custom_call.1} parent=11 // pred_check
          %p289 = pneg %p75
        $region14: #{tpu_custom_call.1} parent=11 // pred_check_branch
          %291 = sbr.rel (%p289) target = $region16
        $region15: #{tpu_custom_call.1} parent=11 // pred_region
          %s293 = ssub.s32 2048, 2048
          %294 = vsyncadd [#allocation6], %s293
          %s295 = sshll.u32 [#allocation5], 4
          %s296 = int_to_ptr.vmem [resolvable:$true] %s295
          %301 = dma.hbm_to_vmem [thread:$0]  %s1, 2048, %s296, [#allocation6], 128, 128, 8
        $region16: #{tpu_custom_call.1} parent=11 // pred_fallthru
          _
        // Predicated region
        $region17: #{tpu_custom_call.1} parent=11 // pred_check
          %p302 = pneg %p96
        $region18: #{tpu_custom_call.1} parent=11 // pred_check_branch
          %304 = sbr.rel (%p302) target = $region20
        $region19: #{tpu_custom_call.1} parent=11 // pred_region
          _
        $region20: #{tpu_custom_call.1} parent=11 // pred_fallthru
          _
        // Predicated region
        $region21: #{tpu_custom_call.1} parent=11 // pred_check
          %p305 = pneg %p117
        $region22: #{tpu_custom_call.1} parent=11 // pred_check_branch
          %307 = sbr.rel (%p305) target = $region24
        $region23: #{tpu_custom_call.1} parent=11 // pred_region
          %s309 = ssub.s32 2048, 2048
          %310 = vsyncadd [#allocation6], %s309
          %s311 = sshll.u32 [#allocation7], 4
          %s312 = int_to_ptr.vmem [resolvable:$true] %s311
          %317 = dma.hbm_to_vmem [thread:$0]  %s3, 2048, %s312, [#allocation6], 128, 128, 8
        $region24: #{tpu_custom_call.1} parent=11 // pred_fallthru
          _
        // Predicated region
        $region25: #{tpu_custom_call.1} parent=11 // pred_check
          %p318 = pneg %p138
        $region26: #{tpu_custom_call.1} parent=11 // pred_check_branch
          %320 = sbr.rel (%p318) target = $region28
        $region27: #{tpu_custom_call.1} parent=11 // pred_region
          _
        $region28: #{tpu_custom_call.1} parent=11 // pred_fallthru
          _
        // Predicated region
        $region29: #{tpu_custom_call.1} parent=11 // pred_check
          %p321 = pneg %p159
        $region30: #{tpu_custom_call.1} parent=11 // pred_check_branch
          %323 = sbr.rel (%p321) target = $region32
        $region31: #{tpu_custom_call.1} parent=11 // pred_region
          %s325 = ssub.s32 2048, 2048
          %326 = vsyncadd [#allocation9], %s325
          %s327 = sshll.u32 [#allocation8], 4
          %s328 = int_to_ptr.vmem [resolvable:$true] %s327
          %333 = dma.hbm_to_vmem [thread:$0]  %s5, 2048, %s328, [#allocation9], 128, 128, 8
        $region32: #{tpu_custom_call.1} parent=11 // pred_fallthru
          _
        // Predicated region
        $region33: #{tpu_custom_call.1} parent=11 // pred_check
          %p334 = pneg %p180
        $region34: #{tpu_custom_call.1} parent=11 // pred_check_branch
          %336 = sbr.rel (%p334) target = $region36
        $region35: #{tpu_custom_call.1} parent=11 // pred_region
          _
        $region36: #{tpu_custom_call.1} parent=11 // pred_fallthru
          _
        // Predicated region
        $region37: #{tpu_custom_call.1} parent=11 // pred_check
          %p337 = pneg %p201
        $region38: #{tpu_custom_call.1} parent=11 // pred_check_branch
          %339 = sbr.rel (%p337) target = $region40
        $region39: #{tpu_custom_call.1} parent=11 // pred_region
          %s341 = ssub.s32 2048, 2048
          %342 = vsyncadd [#allocation9], %s341
          %s343 = sshll.u32 [#allocation10], 4
          %s344 = int_to_ptr.vmem [resolvable:$true] %s343
          %349 = dma.hbm_to_vmem [thread:$0]  %s7, 2048, %s344, [#allocation9], 128, 128, 8
        $region40: #{tpu_custom_call.1} parent=11 // pred_fallthru
          _
        // Predicated region
        $region41: #{tpu_custom_call.1} parent=11 // pred_check
          %p350 = pneg %p222
        $region42: #{tpu_custom_call.1} parent=11 // pred_check_branch
          %352 = sbr.rel (%p350) target = $region44
        $region43: #{tpu_custom_call.1} parent=11 // pred_region
          _
        $region44: #{tpu_custom_call.1} parent=11 // pred_fallthru
          _
      $region12: #{tpu_custom_call.1} parent=5 // pred_fallthru
        _
      %p353 = scmp.lt.s32.totalorder %s28, 2
      // Predicated region
      $region45: #{tpu_custom_call.1} parent=5 // pred_check
        %p354 = pneg %p353
      $region46: #{tpu_custom_call.1} parent=5 // pred_check_branch
        %356 = sbr.rel (%p354) target = $region48
      $region47: #{tpu_custom_call.1} parent=5 // pred_region
        // Predicated region
        $region49: #{tpu_custom_call.1} parent=47 // pred_check
          %p357 = pneg %p48
        $region50: #{tpu_custom_call.1} parent=47 // pred_check_branch
          %359 = sbr.rel (%p357) target = $region52
        $region51: #{tpu_custom_call.1} parent=47 // pred_region
          %s360 = sand.u32 %s38, 1
          %s361 = scalar_lea.sflag [#allocation3], %s360
          %s362 = sand.u32 %s38, 1
          %s363 = smul.addr %s362, 16
          %s364 = scalar_lea.vmem [#allocation2], %s363
          %s365 = smul.u32 2, %s28
          %s367 = ssub.s32 256, 256
          %368 = vsyncadd %s361, %s367
          %s369 = smul.addr %s365, 128
          %s370 = scalar_lea.hbm %s0, %s369
          %s371 = sshll.u32 %s364, 4
          %s372 = int_to_ptr.vmem [resolvable:$true] %s371
          %377 = dma.hbm_to_vmem [thread:$0]  %s370, 256, %s372, %s361, 128, 128, 8
        $region52: #{tpu_custom_call.1} parent=47 // pred_fallthru
          _
      $region48: #{tpu_custom_call.1} parent=5 // pred_fallthru
        _
      %p378 = scmp.le.s32.totalorder 1, %s28
      %p379 = scmp.lt.s32.totalorder %s28, 3
      %p380 = pnand %p378, %p379
      %p381 = pneg %p380
      // Predicated region
      $region53: #{tpu_custom_call.1} parent=5 // pred_check
        _
      $region54: #{tpu_custom_call.1} parent=5 // pred_check_branch
        %383 = sbr.rel (%p380) target = $region56
      $region55: #{tpu_custom_call.1} parent=5 // pred_region
        %s384 = ssub.s32 %s28, 1
        %s385 = sand.u32 %s41, 1
        %s386 = scalar_lea.sflag [#allocation3], %s385
        %s387 = sand.u32 %s41, 1
        %s388 = smul.addr %s387, 16
        %s389 = scalar_lea.vmem [#allocation2], %s388
        // Predicated region
        $region57: #{tpu_custom_call.1} parent=55 // pred_check
          %p390 = pneg %p54
        $region58: #{tpu_custom_call.1} parent=55 // pred_check_branch
          %392 = sbr.rel (%p390) target = $region60
        $region59: #{tpu_custom_call.1} parent=55 // pred_region
          %393 = dma.done %s386, 256
        $region60: #{tpu_custom_call.1} parent=55 // pred_fallthru
          _
        // Predicated region
        $region61: #{tpu_custom_call.1} parent=55 // pred_check
          %p394 = pneg %p75
        $region62: #{tpu_custom_call.1} parent=55 // pred_check_branch
          %396 = sbr.rel (%p394) target = $region64
        $region63: #{tpu_custom_call.1} parent=55 // pred_region
          %397 = dma.done [#allocation6], 2048
        $region64: #{tpu_custom_call.1} parent=55 // pred_fallthru
          _
        // Predicated region
        $region65: #{tpu_custom_call.1} parent=55 // pred_check
          %p398 = pneg %p117
        $region66: #{tpu_custom_call.1} parent=55 // pred_check_branch
          %400 = sbr.rel (%p398) target = $region68
        $region67: #{tpu_custom_call.1} parent=55 // pred_region
          %401 = dma.done [#allocation6], 2048
        $region68: #{tpu_custom_call.1} parent=55 // pred_fallthru
          _
        // Predicated region
        $region69: #{tpu_custom_call.1} parent=55 // pred_check
          %p402 = pneg %p159
        $region70: #{tpu_custom_call.1} parent=55 // pred_check_branch
          %404 = sbr.rel (%p402) target = $region72
        $region71: #{tpu_custom_call.1} parent=55 // pred_region
          %405 = dma.done [#allocation9], 2048
        $region72: #{tpu_custom_call.1} parent=55 // pred_fallthru
          _
        // Predicated region
        $region73: #{tpu_custom_call.1} parent=55 // pred_check
          %p406 = pneg %p201
        $region74: #{tpu_custom_call.1} parent=55 // pred_check_branch
          %408 = sbr.rel (%p406) target = $region76
        $region75: #{tpu_custom_call.1} parent=55 // pred_region
          %409 = dma.done [#allocation9], 2048
        $region76: #{tpu_custom_call.1} parent=55 // pred_fallthru
          _
        %s410 = sand.u32 %s41, 1
        %s411 = scalar_lea.sflag [#allocation3], %s410
        %s412 = sand.u32 %s41, 1
        %s413 = smul.addr %s412, 16
        %s414 = scalar_lea.vmem [#allocation2], %s413
        %p415 = pneg %p54
        %p416 = pneg %p51
        %p417 = pneg %p75
        %p418 = pneg %p72
        %p419 = pneg %p96
        %p420 = pneg %p93
        %p421 = pneg %p117
        %p422 = pneg %p114
        %p423 = pneg %p138
        %p424 = pneg %p135
        %p425 = pneg %p159
        %p426 = pneg %p156
        %p427 = pneg %p180
        %p428 = pneg %p177
        %p429 = pneg %p201
        %p430 = pneg %p198
        %p431 = pneg %p222
        %p432 = pneg %p219
        %p433 = pneg %p248
        %p434 = pneg %p245
        %s435 = sand.u32 %s235, 1
        %s436 = scalar_lea.sflag [#allocation4], %s435
        %s437 = sand.u32 %s235, 1
        %s438 = smul.addr %s437, 16
        %s439 = scalar_lea.vmem [#allocation11], %s438
        %p440 = pneg %p274
        %p441 = pneg %p271
        %s442 = sand.u32 %s261, 1
        %s443 = scalar_lea.sflag [#allocation13], %s442
        %s444 = sand.u32 %s261, 1
        %s445 = smul.addr %s444, 16
        %s446 = scalar_lea.vmem [#allocation12], %s445
        %s447 = smul.u32 2, %s33
        %s448 = smul.u32 2, %s33
        %s449 = smul.u32 2, %s33
        %v450 = vld [vmem:[%s389] sm:$0xff]
        %v451 = vld [vmem:[%s389 + $0x8] sm:$0xff]
        %v452 = vld [vmem:[#allocation5] sm:$0xff]
        %v453 = vld [vmem:[#allocation5 + $0x8] sm:$0xff]
        %v454 = vld [vmem:[#allocation5 + $0x10] sm:$0xff]
        %v455 = vld [vmem:[#allocation5 + $0x18] sm:$0xff]
        %v456 = vld [vmem:[#allocation5 + $0x20] sm:$0xff]
        %v457 = vld [vmem:[#allocation5 + $0x28] sm:$0xff]
        %v458 = vld [vmem:[#allocation5 + $0x30] sm:$0xff]
        %v459 = vld [vmem:[#allocation5 + $0x38] sm:$0xff]
        %v460 = vld [vmem:[#allocation5 + $0x40] sm:$0xff]
        %v461 = vld [vmem:[#allocation5 + $0x48] sm:$0xff]
        %v462 = vld [vmem:[#allocation5 + $0x50] sm:$0xff]
        %v463 = vld [vmem:[#allocation5 + $0x58] sm:$0xff]
        %v464 = vld [vmem:[#allocation5 + $0x60] sm:$0xff]
        %v465 = vld [vmem:[#allocation5 + $0x68] sm:$0xff]
        %v466 = vld [vmem:[#allocation5 + $0x70] sm:$0xff]
        %v467 = vld [vmem:[#allocation5 + $0x78] sm:$0xff]
        %v468 = vld [vmem:[%s2] sm:$0x1]
        %v470 = vlaneseq
        %v471 = vshrl.u32 %v470, 7
        %v472 = vsub.s32 0, %v471
        %v473 = vrot.slane %v468, %v472
        %475 = vmatprep.subr.mxu0 0.0
        %476 = vmatpush1.msra.mxu0 %v452
        %477 = vmatprep.subr.mxu0 0.0
        %478 = vmatpush1.msra.mxu0 %v453
        %479 = vmatprep.subr.mxu0 0.0
        %480 = vmatpush1.msra.mxu0 %v454
        %481 = vmatprep.subr.mxu0 0.0
        %482 = vmatpush1.msra.mxu0 %v455
        %483 = vmatprep.subr.mxu0 0.0
        %484 = vmatpush1.msra.mxu0 %v456
        %485 = vmatprep.subr.mxu0 0.0
        %486 = vmatpush1.msra.mxu0 %v457
        %487 = vmatprep.subr.mxu0 0.0
        %488 = vmatpush1.msra.mxu0 %v458
        %489 = vmatprep.subr.mxu0 0.0
        %490 = vmatpush1.msra.mxu0 %v459
        %491 = vmatprep.subr.mxu0 0.0
        %492 = vmatpush1.msra.mxu0 %v460
        %493 = vmatprep.subr.mxu0 0.0
        %494 = vmatpush1.msra.mxu0 %v461
        %495 = vmatprep.subr.mxu0 0.0
        %496 = vmatpush1.msra.mxu0 %v462
        %497 = vmatprep.subr.mxu0 0.0
        %498 = vmatpush1.msra.mxu0 %v463
        %499 = vmatprep.subr.mxu0 0.0
        %500 = vmatpush1.msra.mxu0 %v464
        %501 = vmatprep.subr.mxu0 0.0
        %502 = vmatpush1.msra.mxu0 %v465
        %503 = vmatprep.subr.mxu0 0.0
        %504 = vmatpush1.msra.mxu0 %v466
        %505 = vmatprep.subr.mxu0 0.0
        %506 = vmatpush1.msra.mxu0 %v467
        %507 = vmatprep.subr.mxu0 0.0
        %508 = vmatpush1.msra.mxu0 0.0
        %509 = vmatprep.subr.mxu0 0.0
        %510 = vmatpush1.msra.mxu0 0.0
        %511 = vmatprep.subr.mxu0 0.0
        %512 = vmatpush1.msra.mxu0 0.0
        %513 = vmatprep.subr.mxu0 0.0
        %514 = vmatpush1.msra.mxu0 0.0
        %515 = vmatprep.subr.mxu0 0.0
        %516 = vmatpush1.msra.mxu0 0.0
        %517 = vmatprep.subr.mxu0 0.0
        %518 = vmatpush1.msra.mxu0 0.0
        %519 = vmatprep.subr.mxu0 0.0
        %520 = vmatpush1.msra.mxu0 0.0
        %521 = vmatprep.subr.mxu0 0.0
        %522 = vmatpush1.msra.mxu0 0.0
        %523 = vmatprep.subr.mxu0 0.0
        %524 = vmatpush1.msra.mxu0 0.0
        %525 = vmatprep.subr.mxu0 0.0
        %526 = vmatpush1.msra.mxu0 0.0
        %527 = vmatprep.subr.mxu0 0.0
        %528 = vmatpush1.msra.mxu0 0.0
        %529 = vmatprep.subr.mxu0 0.0
        %530 = vmatpush1.msra.mxu0 0.0
        %531 = vmatprep.subr.mxu0 0.0
        %532 = vmatpush1.msra.mxu0 0.0
        %533 = vmatprep.subr.mxu0 0.0
        %534 = vmatpush1.msra.mxu0 0.0
        %535 = vmatprep.subr.mxu0 0.0
        %536 = vmatpush1.msra.mxu0 0.0
        %537 = vmatprep.subr.mxu0 0.0
        %538 = vmatpush1.msra.mxu0 0.0
        %539 = vmatprep.mubr.f32.mxu0 0.0
        %540 = vmatmul.mubr.f32.gmra.mrb[0].mxu0 %v450
        %v541 = vpop.f32.mrb[0].mxu0
        %v542 = vadd.f32 %v473, %v541
        %v543 = vpop.f32.mrb[0].mxu0
        %544 = vmatprep.mubr.f32.mxu0 0.0
        %545 = vmatmul.mubr.f32.gmra.mrb[0].mxu0 %v451
        %v546 = vpop.f32.mrb[0].mxu0
        %v547 = vadd.f32 %v473, %v546
        %v548 = vpop.f32.mrb[0].mxu0
        %549 = vdwg.mxu0
        %v550 = vmax.f32 %v542, 0.0
        %v551 = vmax.f32 %v547, 0.0
        %v552 = vld [vmem:[#allocation7] sm:$0xff]
        %v553 = vld [vmem:[#allocation7 + $0x8] sm:$0xff]
        %v554 = vld [vmem:[#allocation7 + $0x10] sm:$0xff]
        %v555 = vld [vmem:[#allocation7 + $0x18] sm:$0xff]
        %v556 = vld [vmem:[#allocation7 + $0x20] sm:$0xff]
        %v557 = vld [vmem:[#allocation7 + $0x28] sm:$0xff]
        %v558 = vld [vmem:[#allocation7 + $0x30] sm:$0xff]
        %v559 = vld [vmem:[#allocation7 + $0x38] sm:$0xff]
        %v560 = vld [vmem:[#allocation7 + $0x40] sm:$0xff]
        %v561 = vld [vmem:[#allocation7 + $0x48] sm:$0xff]
        %v562 = vld [vmem:[#allocation7 + $0x50] sm:$0xff]
        %v563 = vld [vmem:[#allocation7 + $0x58] sm:$0xff]
        %v564 = vld [vmem:[#allocation7 + $0x60] sm:$0xff]
        %v565 = vld [vmem:[#allocation7 + $0x68] sm:$0xff]
        %v566 = vld [vmem:[#allocation7 + $0x70] sm:$0xff]
        %v567 = vld [vmem:[#allocation7 + $0x78] sm:$0xff]
        %v568 = vld [vmem:[%s4] sm:$0x1]
        %v570 = vlaneseq
        %v571 = vshrl.u32 %v570, 7
        %v572 = vsub.s32 0, %v571
        %v573 = vrot.slane %v568, %v572
        %575 = vmatprep.subr.mxu0 0.0
        %576 = vmatpush1.msra.mxu0 %v552
        %577 = vmatprep.subr.mxu0 0.0
        %578 = vmatpush1.msra.mxu0 %v553
        %579 = vmatprep.subr.mxu0 0.0
        %580 = vmatpush1.msra.mxu0 %v554
        %581 = vmatprep.subr.mxu0 0.0
        %582 = vmatpush1.msra.mxu0 %v555
        %583 = vmatprep.subr.mxu0 0.0
        %584 = vmatpush1.msra.mxu0 %v556
        %585 = vmatprep.subr.mxu0 0.0
        %586 = vmatpush1.msra.mxu0 %v557
        %587 = vmatprep.subr.mxu0 0.0
        %588 = vmatpush1.msra.mxu0 %v558
        %589 = vmatprep.subr.mxu0 0.0
        %590 = vmatpush1.msra.mxu0 %v559
        %591 = vmatprep.subr.mxu0 0.0
        %592 = vmatpush1.msra.mxu0 %v560
        %593 = vmatprep.subr.mxu0 0.0
        %594 = vmatpush1.msra.mxu0 %v561
        %595 = vmatprep.subr.mxu0 0.0
        %596 = vmatpush1.msra.mxu0 %v562
        %597 = vmatprep.subr.mxu0 0.0
        %598 = vmatpush1.msra.mxu0 %v563
        %599 = vmatprep.subr.mxu0 0.0
        %600 = vmatpush1.msra.mxu0 %v564
        %601 = vmatprep.subr.mxu0 0.0
        %602 = vmatpush1.msra.mxu0 %v565
        %603 = vmatprep.subr.mxu0 0.0
        %604 = vmatpush1.msra.mxu0 %v566
        %605 = vmatprep.subr.mxu0 0.0
        %606 = vmatpush1.msra.mxu0 %v567
        %607 = vmatprep.subr.mxu0 0.0
        %608 = vmatpush1.msra.mxu0 0.0
        %609 = vmatprep.subr.mxu0 0.0
        %610 = vmatpush1.msra.mxu0 0.0
        %611 = vmatprep.subr.mxu0 0.0
        %612 = vmatpush1.msra.mxu0 0.0
        %613 = vmatprep.subr.mxu0 0.0
        %614 = vmatpush1.msra.mxu0 0.0
        %615 = vmatprep.subr.mxu0 0.0
        %616 = vmatpush1.msra.mxu0 0.0
        %617 = vmatprep.subr.mxu0 0.0
        %618 = vmatpush1.msra.mxu0 0.0
        %619 = vmatprep.subr.mxu0 0.0
        %620 = vmatpush1.msra.mxu0 0.0
        %621 = vmatprep.subr.mxu0 0.0
        %622 = vmatpush1.msra.mxu0 0.0
        %623 = vmatprep.subr.mxu0 0.0
        %624 = vmatpush1.msra.mxu0 0.0
        %625 = vmatprep.subr.mxu0 0.0
        %626 = vmatpush1.msra.mxu0 0.0
        %627 = vmatprep.subr.mxu0 0.0
        %628 = vmatpush1.msra.mxu0 0.0
        %629 = vmatprep.subr.mxu0 0.0
        %630 = vmatpush1.msra.mxu0 0.0
        %631 = vmatprep.subr.mxu0 0.0
        %632 = vmatpush1.msra.mxu0 0.0
        %633 = vmatprep.subr.mxu0 0.0
        %634 = vmatpush1.msra.mxu0 0.0
        %635 = vmatprep.subr.mxu0 0.0
        %636 = vmatpush1.msra.mxu0 0.0
        %637 = vmatprep.subr.mxu0 0.0
        %638 = vmatpush1.msra.mxu0 0.0
        %639 = vmatprep.mubr.f32.mxu0 0.0
        %640 = vmatmul.mubr.f32.gmra.mrb[0].mxu0 %v550
        %v641 = vpop.f32.mrb[0].mxu0
        %v642 = vadd.f32 %v573, %v641
        %v643 = vpop.f32.mrb[0].mxu0
        %644 = vmatprep.mubr.f32.mxu0 0.0
        %645 = vmatmul.mubr.f32.gmra.mrb[0].mxu0 %v551
        %v646 = vpop.f32.mrb[0].mxu0
        %v647 = vadd.f32 %v573, %v646
        %v648 = vpop.f32.mrb[0].mxu0
        %649 = vdwg.mxu0
        %v650 = vmax.f32 %v642, 0.0
        %v651 = vmax.f32 %v647, 0.0
        %652 = vst [vmem:[%s446] sm:$0xff] %v650
        %653 = vst [vmem:[%s446 + $0x8] sm:$0xff] %v651
        %v654 = vld [vmem:[#allocation8] sm:$0xff]
        %v655 = vld [vmem:[#allocation8 + $0x8] sm:$0xff]
        %v656 = vld [vmem:[#allocation8 + $0x10] sm:$0xff]
        %v657 = vld [vmem:[#allocation8 + $0x18] sm:$0xff]
        %v658 = vld [vmem:[#allocation8 + $0x20] sm:$0xff]
        %v659 = vld [vmem:[#allocation8 + $0x28] sm:$0xff]
        %v660 = vld [vmem:[#allocation8 + $0x30] sm:$0xff]
        %v661 = vld [vmem:[#allocation8 + $0x38] sm:$0xff]
        %v662 = vld [vmem:[#allocation8 + $0x40] sm:$0xff]
        %v663 = vld [vmem:[#allocation8 + $0x48] sm:$0xff]
        %v664 = vld [vmem:[#allocation8 + $0x50] sm:$0xff]
        %v665 = vld [vmem:[#allocation8 + $0x58] sm:$0xff]
        %v666 = vld [vmem:[#allocation8 + $0x60] sm:$0xff]
        %v667 = vld [vmem:[#allocation8 + $0x68] sm:$0xff]
        %v668 = vld [vmem:[#allocation8 + $0x70] sm:$0xff]
        %v669 = vld [vmem:[#allocation8 + $0x78] sm:$0xff]
        %v670 = vld [vmem:[%s6] sm:$0x1]
        %v672 = vlaneseq
        %v673 = vshrl.u32 %v672, 7
        %v674 = vsub.s32 0, %v673
        %v675 = vrot.slane %v670, %v674
        %677 = vmatprep.subr.mxu0 0.0
        %678 = vmatpush1.msra.mxu0 %v654
        %679 = vmatprep.subr.mxu0 0.0
        %680 = vmatpush1.msra.mxu0 %v655
        %681 = vmatprep.subr.mxu0 0.0
        %682 = vmatpush1.msra.mxu0 %v656
        %683 = vmatprep.subr.mxu0 0.0
        %684 = vmatpush1.msra.mxu0 %v657
        %685 = vmatprep.subr.mxu0 0.0
        %686 = vmatpush1.msra.mxu0 %v658
        %687 = vmatprep.subr.mxu0 0.0
        %688 = vmatpush1.msra.mxu0 %v659
        %689 = vmatprep.subr.mxu0 0.0
        %690 = vmatpush1.msra.mxu0 %v660
        %691 = vmatprep.subr.mxu0 0.0
        %692 = vmatpush1.msra.mxu0 %v661
        %693 = vmatprep.subr.mxu0 0.0
        %694 = vmatpush1.msra.mxu0 %v662
        %695 = vmatprep.subr.mxu0 0.0
        %696 = vmatpush1.msra.mxu0 %v663
        %697 = vmatprep.subr.mxu0 0.0
        %698 = vmatpush1.msra.mxu0 %v664
        %699 = vmatprep.subr.mxu0 0.0
        %700 = vmatpush1.msra.mxu0 %v665
        %701 = vmatprep.subr.mxu0 0.0
        %702 = vmatpush1.msra.mxu0 %v666
        %703 = vmatprep.subr.mxu0 0.0
        %704 = vmatpush1.msra.mxu0 %v667
        %705 = vmatprep.subr.mxu0 0.0
        %706 = vmatpush1.msra.mxu0 %v668
        %707 = vmatprep.subr.mxu0 0.0
        %708 = vmatpush1.msra.mxu0 %v669
        %709 = vmatprep.subr.mxu0 0.0
        %710 = vmatpush1.msra.mxu0 0.0
        %711 = vmatprep.subr.mxu0 0.0
        %712 = vmatpush1.msra.mxu0 0.0
        %713 = vmatprep.subr.mxu0 0.0
        %714 = vmatpush1.msra.mxu0 0.0
        %715 = vmatprep.subr.mxu0 0.0
        %716 = vmatpush1.msra.mxu0 0.0
        %717 = vmatprep.subr.mxu0 0.0
        %718 = vmatpush1.msra.mxu0 0.0
        %719 = vmatprep.subr.mxu0 0.0
        %720 = vmatpush1.msra.mxu0 0.0
        %721 = vmatprep.subr.mxu0 0.0
        %722 = vmatpush1.msra.mxu0 0.0
        %723 = vmatprep.subr.mxu0 0.0
        %724 = vmatpush1.msra.mxu0 0.0
        %725 = vmatprep.subr.mxu0 0.0
        %726 = vmatpush1.msra.mxu0 0.0
        %727 = vmatprep.subr.mxu0 0.0
        %728 = vmatpush1.msra.mxu0 0.0
        %729 = vmatprep.subr.mxu0 0.0
        %730 = vmatpush1.msra.mxu0 0.0
        %731 = vmatprep.subr.mxu0 0.0
        %732 = vmatpush1.msra.mxu0 0.0
        %733 = vmatprep.subr.mxu0 0.0
        %734 = vmatpush1.msra.mxu0 0.0
        %735 = vmatprep.subr.mxu0 0.0
        %736 = vmatpush1.msra.mxu0 0.0
        %737 = vmatprep.subr.mxu0 0.0
        %738 = vmatpush1.msra.mxu0 0.0
        %739 = vmatprep.subr.mxu0 0.0
        %740 = vmatpush1.msra.mxu0 0.0
        %741 = vmatprep.mubr.f32.mxu0 0.0
        %742 = vmatmul.mubr.f32.gmra.mrb[0].mxu0 %v650
        %v743 = vpop.f32.mrb[0].mxu0
        %v744 = vadd.f32 %v675, %v743
        %v745 = vpop.f32.mrb[0].mxu0
        %746 = vmatprep.mubr.f32.mxu0 0.0
        %747 = vmatmul.mubr.f32.gmra.mrb[0].mxu0 %v651
        %v748 = vpop.f32.mrb[0].mxu0
        %v749 = vadd.f32 %v675, %v748
        %v750 = vpop.f32.mrb[0].mxu0
        %751 = vdwg.mxu0
        %v752 = vmax.f32 %v744, 0.0
        %v753 = vmax.f32 %v749, 0.0
        %v754 = vld [vmem:[#allocation10] sm:$0xff]
        %v755 = vld [vmem:[#allocation10 + $0x8] sm:$0xff]
        %v756 = vld [vmem:[#allocation10 + $0x10] sm:$0xff]
        %v757 = vld [vmem:[#allocation10 + $0x18] sm:$0xff]
        %v758 = vld [vmem:[#allocation10 + $0x20] sm:$0xff]
        %v759 = vld [vmem:[#allocation10 + $0x28] sm:$0xff]
        %v760 = vld [vmem:[#allocation10 + $0x30] sm:$0xff]
        %v761 = vld [vmem:[#allocation10 + $0x38] sm:$0xff]
        %v762 = vld [vmem:[#allocation10 + $0x40] sm:$0xff]
        %v763 = vld [vmem:[#allocation10 + $0x48] sm:$0xff]
        %v764 = vld [vmem:[#allocation10 + $0x50] sm:$0xff]
        %v765 = vld [vmem:[#allocation10 + $0x58] sm:$0xff]
        %v766 = vld [vmem:[#allocation10 + $0x60] sm:$0xff]
        %v767 = vld [vmem:[#allocation10 + $0x68] sm:$0xff]
        %v768 = vld [vmem:[#allocation10 + $0x70] sm:$0xff]
        %v769 = vld [vmem:[#allocation10 + $0x78] sm:$0xff]
        %v770 = vld [vmem:[%s8] sm:$0x1]
        %v772 = vlaneseq
        %v773 = vshrl.u32 %v772, 7
        %v774 = vsub.s32 0, %v773
        %v775 = vrot.slane %v770, %v774
        %777 = vmatprep.subr.mxu0 0.0
        %778 = vmatpush1.msra.mxu0 %v754
        %779 = vmatprep.subr.mxu0 0.0
        %780 = vmatpush1.msra.mxu0 %v755
        %781 = vmatprep.subr.mxu0 0.0
        %782 = vmatpush1.msra.mxu0 %v756
        %783 = vmatprep.subr.mxu0 0.0
        %784 = vmatpush1.msra.mxu0 %v757
        %785 = vmatprep.subr.mxu0 0.0
        %786 = vmatpush1.msra.mxu0 %v758
        %787 = vmatprep.subr.mxu0 0.0
        %788 = vmatpush1.msra.mxu0 %v759
        %789 = vmatprep.subr.mxu0 0.0
        %790 = vmatpush1.msra.mxu0 %v760
        %791 = vmatprep.subr.mxu0 0.0
        %792 = vmatpush1.msra.mxu0 %v761
        %793 = vmatprep.subr.mxu0 0.0
        %794 = vmatpush1.msra.mxu0 %v762
        %795 = vmatprep.subr.mxu0 0.0
        %796 = vmatpush1.msra.mxu0 %v763
        %797 = vmatprep.subr.mxu0 0.0
        %798 = vmatpush1.msra.mxu0 %v764
        %799 = vmatprep.subr.mxu0 0.0
        %800 = vmatpush1.msra.mxu0 %v765
        %801 = vmatprep.subr.mxu0 0.0
        %802 = vmatpush1.msra.mxu0 %v766
        %803 = vmatprep.subr.mxu0 0.0
        %804 = vmatpush1.msra.mxu0 %v767
        %805 = vmatprep.subr.mxu0 0.0
        %806 = vmatpush1.msra.mxu0 %v768
        %807 = vmatprep.subr.mxu0 0.0
        %808 = vmatpush1.msra.mxu0 %v769
        %809 = vmatprep.subr.mxu0 0.0
        %810 = vmatpush1.msra.mxu0 0.0
        %811 = vmatprep.subr.mxu0 0.0
        %812 = vmatpush1.msra.mxu0 0.0
        %813 = vmatprep.subr.mxu0 0.0
        %814 = vmatpush1.msra.mxu0 0.0
        %815 = vmatprep.subr.mxu0 0.0
        %816 = vmatpush1.msra.mxu0 0.0
        %817 = vmatprep.subr.mxu0 0.0
        %818 = vmatpush1.msra.mxu0 0.0
        %819 = vmatprep.subr.mxu0 0.0
        %820 = vmatpush1.msra.mxu0 0.0
        %821 = vmatprep.subr.mxu0 0.0
        %822 = vmatpush1.msra.mxu0 0.0
        %823 = vmatprep.subr.mxu0 0.0
        %824 = vmatpush1.msra.mxu0 0.0
        %825 = vmatprep.subr.mxu0 0.0
        %826 = vmatpush1.msra.mxu0 0.0
        %827 = vmatprep.subr.mxu0 0.0
        %828 = vmatpush1.msra.mxu0 0.0
        %829 = vmatprep.subr.mxu0 0.0
        %830 = vmatpush1.msra.mxu0 0.0
        %831 = vmatprep.subr.mxu0 0.0
        %832 = vmatpush1.msra.mxu0 0.0
        %833 = vmatprep.subr.mxu0 0.0
        %834 = vmatpush1.msra.mxu0 0.0
        %835 = vmatprep.subr.mxu0 0.0
        %836 = vmatpush1.msra.mxu0 0.0
        %837 = vmatprep.subr.mxu0 0.0
        %838 = vmatpush1.msra.mxu0 0.0
        %839 = vmatprep.subr.mxu0 0.0
        %840 = vmatpush1.msra.mxu0 0.0
        %841 = vmatprep.mubr.f32.mxu0 0.0
        %842 = vmatmul.mubr.f32.gmra.mrb[0].mxu0 %v752
        %v843 = vpop.f32.mrb[0].mxu0
        %v844 = vadd.f32 %v775, %v843
        %v845 = vpop.f32.mrb[0].mxu0
        %846 = vmatprep.mubr.f32.mxu0 0.0
        %847 = vmatmul.mubr.f32.gmra.mrb[0].mxu0 %v753
        %v848 = vpop.f32.mrb[0].mxu0
        %v849 = vadd.f32 %v775, %v848
        %v850 = vpop.f32.mrb[0].mxu0
        %851 = vdwg.mxu0
        %v852 = vxor.u32 %v844, 2147483648
        %v853 = vxor.u32 %v849, 2147483648
        %v854 = vmul.f32 %v852, 1.442695
        %v855 = vpow.pop %v854
        %v856 = vmul.f32 %v853, 1.442695
        %v857 = vpow.pop %v856
        %v858 = vadd.f32 %v855, 1.0
        %v859 = vadd.f32 %v857, 1.0
        %v860 = vrcp.pop %v858
        %v861 = vmul.f32 1.0, %v860
        %v862 = vrcp.pop %v859
        %v863 = vmul.f32 1.0, %v862
        %864 = vst [vmem:[%s439] sm:$0xff] %v861
        %865 = vst [vmem:[%s439 + $0x8] sm:$0xff] %v863
        %s866 = sand.u32 %s235, 1
        %s867 = scalar_lea.sflag [#allocation4], %s866
        %s868 = sand.u32 %s235, 1
        %s869 = smul.addr %s868, 16
        %s870 = scalar_lea.vmem [#allocation11], %s869
        %s871 = sand.u32 %s261, 1
        %s872 = scalar_lea.sflag [#allocation13], %s871
        %s873 = sand.u32 %s261, 1
        %s874 = smul.addr %s873, 16
        %s875 = scalar_lea.vmem [#allocation12], %s874
        // Predicated region
        $region77: #{tpu_custom_call.1} parent=55 // pred_check
          %p876 = pneg %p245
        $region78: #{tpu_custom_call.1} parent=55 // pred_check_branch
          %878 = sbr.rel (%p876) target = $region80
        $region79: #{tpu_custom_call.1} parent=55 // pred_region
          %s879 = smul.u32 2, %s33
          %s881 = ssub.s32 256, 256
          %882 = vsyncadd %s867, %s881
          %s883 = smul.addr %s879, 128
          %s884 = scalar_lea.hbm %s9, %s883
          %s885 = sshll.u32 %s870, 4
          %s886 = int_to_ptr.vmem [resolvable:$true] %s885
          %891 = dma.vmem_to_hbm [thread:$0]  %s886, 256, %s884, %s867, 128, 128, 8
        $region80: #{tpu_custom_call.1} parent=55 // pred_fallthru
          _
        // Predicated region
        $region81: #{tpu_custom_call.1} parent=55 // pred_check
          %p892 = pneg %p271
        $region82: #{tpu_custom_call.1} parent=55 // pred_check_branch
          %894 = sbr.rel (%p892) target = $region84
        $region83: #{tpu_custom_call.1} parent=55 // pred_region
          %s895 = smul.u32 2, %s33
          %s897 = ssub.s32 256, 256
          %898 = vsyncadd %s872, %s897
          %s899 = smul.addr %s895, 128
          %s900 = scalar_lea.hbm %s10, %s899
          %s901 = sshll.u32 %s875, 4
          %s902 = int_to_ptr.vmem [resolvable:$true] %s901
          %907 = dma.vmem_to_hbm [thread:$0]  %s902, 256, %s900, %s872, 128, 128, 8
        $region84: #{tpu_custom_call.1} parent=55 // pred_fallthru
          _
      $region56: #{tpu_custom_call.1} parent=5 // pred_fallthru
        _
      %p908 = scmp.le.s32.totalorder 2, %s28
      // Predicated region
      $region85: #{tpu_custom_call.1} parent=5 // pred_check
        %p909 = pneg %p908
      $region86: #{tpu_custom_call.1} parent=5 // pred_check_branch
        %911 = sbr.rel (%p909) target = $region88
      $region87: #{tpu_custom_call.1} parent=5 // pred_region
        %s912 = ssub.s32 %s28, 2
        // Predicated region
        $region89: #{tpu_custom_call.1} parent=87 // pred_check
          %p913 = pneg %p251
        $region90: #{tpu_custom_call.1} parent=87 // pred_check_branch
          %915 = sbr.rel (%p913) target = $region92
        $region91: #{tpu_custom_call.1} parent=87 // pred_region
          %s916 = sand.u32 %s236, 1
          %s917 = scalar_lea.sflag [#allocation4], %s916
          %s918 = sand.u32 %s236, 1
          %s919 = smul.addr %s918, 16
          %s920 = scalar_lea.vmem [#allocation11], %s919
          %921 = dma.done %s917, 256
        $region92: #{tpu_custom_call.1} parent=87 // pred_fallthru
          _
        // Predicated region
        $region93: #{tpu_custom_call.1} parent=87 // pred_check
          %p922 = pneg %p277
        $region94: #{tpu_custom_call.1} parent=87 // pred_check_branch
          %924 = sbr.rel (%p922) target = $region96
        $region95: #{tpu_custom_call.1} parent=87 // pred_region
          %s925 = sand.u32 %s262, 1
          %s926 = scalar_lea.sflag [#allocation13], %s925
          %s927 = sand.u32 %s262, 1
          %s928 = smul.addr %s927, 16
          %s929 = scalar_lea.vmem [#allocation12], %s928
          %930 = dma.done %s926, 256
        $region96: #{tpu_custom_call.1} parent=87 // pred_fallthru
          _
      $region88: #{tpu_custom_call.1} parent=5 // pred_fallthru
        _
    $region6: #{tpu_custom_call.1} parent=1 // loop_footer
      %s32 = sadd.s32 1, %s28
    $region7: #{tpu_custom_call.1} parent=1 // loop_footer_branch
      %27 = sbr.rel target = $region3
    $region8: #{tpu_custom_call.1} parent=1 // loop_exit
      _
    %931 = vsyncpa [#allocation3], 1
    %s932 = scalar_lea.sflag [#allocation3], 1
    %933 = vsyncpa %s932, 1
    %934 = vsyncpa [#allocation6], 1
    %935 = vsyncpa [#allocation9], 1
    %936 = vsyncpa [#allocation4], 1
    %s937 = scalar_lea.sflag [#allocation4], 1
    %938 = vsyncpa %s937, 1
    %939 = vsyncpa [#allocation13], 1
    %s940 = scalar_lea.sflag [#allocation13], 1
    %941 = vsyncpa %s940, 1

// kernel: tpu_custom_call.1
$region0: #{tpu_custom_call.1}
  #allocation0 [shape = 'u32[]', space=smem, size = 0x4, offset = 0x4, fixed_abs, tag = 'smem constant byte address 0x4 - core index']
  #allocation1 [shape = 'u32[144,128]{1,0:T(1,128)}', space=vmem, size = 0x12000, scoped, tag = 'internal scratch']
  %s0 = inlined_call_operand.hbm [shape: f32[32,128], index: 0, kind: input, shape index: {}]
  %s1 = inlined_call_operand.hbm [shape: f32[128,128], index: 1, kind: input, shape index: {}]
  %s2 = inlined_call_operand.vmem [shape: f32[1,128], index: 2, kind: input, shape index: {}]
  %s3 = inlined_call_operand.hbm [shape: f32[128,128], index: 3, kind: input, shape index: {}]
  %s4 = inlined_call_operand.vmem [shape: f32[1,128], index: 4, kind: input, shape index: {}]
  %s5 = inlined_call_operand.hbm [shape: f32[128,128], index: 5, kind: input, shape index: {}]
  %s6 = inlined_call_operand.vmem [shape: f32[1,128], index: 6, kind: input, shape index: {}]
  %s7 = inlined_call_operand.hbm [shape: f32[128,128], index: 7, kind: input, shape index: {}]
  %s8 = inlined_call_operand.vmem [shape: f32[1,128], index: 8, kind: input, shape index: {}]
  %s9 = inlined_call_operand.hbm [shape: f32[32,128], index: 9, kind: output, shape index: {0}]
  %s10 = inlined_call_operand.hbm [shape: f32[32,128], index: 10, kind: output, shape index: {1}]
  %11 = xla_tuple %s9, %s10
  %s12 = sld [smem:[#allocation0]]
  $region97: #{tpu_custom_call.1} parent=0
    _
  %s14 = ssub.s32 1, %s12
  %s15 = scalar_select 0, %s14, %s12
  $region1: #{tpu_custom_call.1} parent=0
    #allocation2 [shape = 'u8[16384]{0}', space=vmem, size = 0x4000, scoped, tag = 'input window, operand 0']
    #allocation3 [shape = 's32[2]{0}', space=sflag, size = 0x8, scoped, tag = 'scoped memory for tpu_custom_call.1']
    #allocation4 [shape = 's32[2]{0}', space=sflag, size = 0x8, scoped, tag = 'scoped memory for tpu_custom_call.1']
    #allocation5 [shape = 'u8[65536]{0}', space=vmem, size = 0x10000, scoped, tag = 'input window, operand 1, single buffered']
    #allocation6 [shape = 's32[1]{0}', space=sflag, size = 0x4, scoped, tag = 'scoped memory for tpu_custom_call.1']
    #allocation7 [shape = 'u8[65536]{0}', space=vmem, size = 0x10000, scoped, tag = 'input window, operand 3, single buffered']
    #allocation8 [shape = 'u8[65536]{0}', space=vmem, size = 0x10000, scoped, tag = 'input window, operand 5, single buffered']
    #allocation9 [shape = 's32[1]{0}', space=sflag, size = 0x4, scoped, tag = 'scoped memory for tpu_custom_call.1']
    #allocation10 [shape = 'u8[65536]{0}', space=vmem, size = 0x10000, scoped, tag = 'input window, operand 7, single buffered']
    #allocation11 [shape = 'u8[16384]{0}', space=vmem, size = 0x4000, scoped, tag = 'output window, operand 0']
    #allocation12 [shape = 'u8[16384]{0}', space=vmem, size = 0x4000, scoped, tag = 'output window, operand 1']
    #allocation13 [shape = 's32[2]{0}', space=sflag, size = 0x8, scoped, tag = 'scoped memory for tpu_custom_call.1']
    %16 = vsyncpa [#allocation3], 0
    %s17 = scalar_lea.sflag [#allocation3], 1
    %18 = vsyncpa %s17, 0
    %19 = vsyncpa [#allocation6], 0
    %20 = vsyncpa [#allocation9], 0
    %21 = vsyncpa [#allocation4], 0
    %s22 = scalar_lea.sflag [#allocation4], 1
    %23 = vsyncpa %s22, 0
    %24 = vsyncpa [#allocation13], 0
    %s25 = scalar_lea.sflag [#allocation13], 1
    %26 = vsyncpa %s25, 0
    loop: start=0, step=1, limit=4
    $region2: #{tpu_custom_call.1} parent=1 // loop_pre_header
      _
    $region3: #{tpu_custom_call.1} parent=1 // loop_header
      %s28 = sphi 0, %s32
      %p29 = scmp.ge.s32.totalorder %s28, 4
      %s38 = sphi 0, %s40
      %s41 = sphi 0, %s38
      %s42 = sphi 0, %s41
      %s58 = sphi 0, %s42
      %s62 = sphi 0, %s62
      %s64 = sphi 0, %s62
      %s65 = sphi 0, %s64
      %s79 = sphi 0, %s65
      %s83 = sphi 0, %s83
      %s85 = sphi 0, %s83
      %s86 = sphi 0, %s85
      %s100 = sphi 0, %s86
      %s104 = sphi 0, %s104
      %s106 = sphi 0, %s104
      %s107 = sphi 0, %s106
      %s121 = sphi 0, %s107
      %s125 = sphi 0, %s125
      %s127 = sphi 0, %s125
      %s128 = sphi 0, %s127
      %s142 = sphi 0, %s128
      %s146 = sphi 0, %s146
      %s148 = sphi 0, %s146
      %s149 = sphi 0, %s148
      %s163 = sphi 0, %s149
      %s167 = sphi 0, %s167
      %s169 = sphi 0, %s167
      %s170 = sphi 0, %s169
      %s184 = sphi 0, %s170
      %s188 = sphi 0, %s188
      %s190 = sphi 0, %s188
      %s191 = sphi 0, %s190
      %s205 = sphi 0, %s191
      %s209 = sphi 0, %s209
      %s211 = sphi 0, %s209
      %s212 = sphi 0, %s211
      %s226 = sphi 0, %s212
      %s232 = sphi 0, %s234
      %s235 = sphi 0, %s232
      %s236 = sphi 0, %s235
      %s252 = sphi 0, %s236
      %s258 = sphi 0, %s260
      %s261 = sphi 0, %s258
      %s262 = sphi 0, %s261
      %s278 = sphi 0, %s262
    $region4: #{tpu_custom_call.1} parent=1 // loop_header_branch
      %31 = sbr.rel (%p29) target = $region8
    $region5: #{tpu_custom_call.1} parent=1 // loop_body
      %s33 = ssub.s32 %s28, 1
      %s34 = ssub.s32 %s28, 2
      %s35 = sadd.s32 %s28, 1
      %s36 = ssub.s32 %s28, %s35
      %p37 = scmp.eq.s32.totalorder %s36, 0
      %s39 = sadd.s32 %s38, 1
      %s40 = scalar_select %p37, %s38, %s39
      %p43 = pneg %p37
      %p44 = scmp.eq.s32.totalorder %s28, 1
      %p45 = por %p43, %p44
      %p46 = scmp.ne.s32.totalorder %s38, %s41
      %p47 = scmp.eq.s32.totalorder %s28, 0
      %p48 = por %p46, %p47
      %p49 = scmp.ne.s32.totalorder %s38, %s41
      %p50 = scmp.eq.s32.totalorder %s33, 1
      %p51 = por %p49, %p50
      %p52 = scmp.ne.s32.totalorder %s41, %s42
      %p53 = scmp.eq.s32.totalorder %s33, 0
      %p54 = por %p52, %p53
      %p55 = scmp.ne.s32.totalorder %s41, %s42
      %p56 = scmp.eq.s32.totalorder %s34, 1
      %p57 = por %p55, %p56
      %p59 = scmp.ne.s32.totalorder %s42, %s58
      %p60 = scmp.eq.s32.totalorder %s34, 0
      %p61 = por %p59, %p60
      %s63 = sadd.s32 %s62, 1
      %p66 = scmp.eq.s32.totalorder %s28, 1
      %p67 = scmp.ne.s32.totalorder %s62, %s64
      %p68 = scmp.eq.s32.totalorder %s28, 0
      %p69 = por %p67, %p68
      %p70 = scmp.ne.s32.totalorder %s62, %s64
      %p71 = scmp.eq.s32.totalorder %s33, 1
      %p72 = por %p70, %p71
      %p73 = scmp.ne.s32.totalorder %s64, %s65
      %p74 = scmp.eq.s32.totalorder %s33, 0
      %p75 = por %p73, %p74
      %p76 = scmp.ne.s32.totalorder %s64, %s65
      %p77 = scmp.eq.s32.totalorder %s34, 1
      %p78 = por %p76, %p77
      %p80 = scmp.ne.s32.totalorder %s65, %s79
      %p81 = scmp.eq.s32.totalorder %s34, 0
      %p82 = por %p80, %p81
      %s84 = sadd.s32 %s83, 1
      %p87 = scmp.eq.s32.totalorder %s28, 1
      %p88 = scmp.ne.s32.totalorder %s83, %s85
      %p89 = scmp.eq.s32.totalorder %s28, 0
      %p90 = por %p88, %p89
      %p91 = scmp.ne.s32.totalorder %s83, %s85
      %p92 = scmp.eq.s32.totalorder %s33, 1
      %p93 = por %p91, %p92
      %p94 = scmp.ne.s32.totalorder %s85, %s86
      %p95 = scmp.eq.s32.totalorder %s33, 0
      %p96 = por %p94, %p95
      %p97 = scmp.ne.s32.totalorder %s85, %s86
      %p98 = scmp.eq.s32.totalorder %s34, 1
      %p99 = por %p97, %p98
      %p101 = scmp.ne.s32.totalorder %s86, %s100
      %p102 = scmp.eq.s32.totalorder %s34, 0
      %p103 = por %p101, %p102
      %s105 = sadd.s32 %s104, 1
      %p108 = scmp.eq.s32.totalorder %s28, 1
      %p109 = scmp.ne.s32.totalorder %s104, %s106
      %p110 = scmp.eq.s32.totalorder %s28, 0
      %p111 = por %p109, %p110
      %p112 = scmp.ne.s32.totalorder %s104, %s106
      %p113 = scmp.eq.s32.totalorder %s33, 1
      %p114 = por %p112, %p113
      %p115 = scmp.ne.s32.totalorder %s106, %s107
      %p116 = scmp.eq.s32.totalorder %s33, 0
      %p117 = por %p115, %p116
      %p118 = scmp.ne.s32.totalorder %s106, %s107
      %p119 = scmp.eq.s32.totalorder %s34, 1
      %p120 = por %p118, %p119
      %p122 = scmp.ne.s32.totalorder %s107, %s121
      %p123 = scmp.eq.s32.totalorder %s34, 0
      %p124 = por %p122, %p123
      %s126 = sadd.s32 %s125, 1
      %p129 = scmp.eq.s32.totalorder %s28, 1
      %p130 = scmp.ne.s32.totalorder %s125, %s127
      %p131 = scmp.eq.s32.totalorder %s28, 0
      %p132 = por %p130, %p131
      %p133 = scmp.ne.s32.totalorder %s125, %s127
      %p134 = scmp.eq.s32.totalorder %s33, 1
      %p135 = por %p133, %p134
      %p136 = scmp.ne.s32.totalorder %s127, %s128
      %p137 = scmp.eq.s32.totalorder %s33, 0
      %p138 = por %p136, %p137
      %p139 = scmp.ne.s32.totalorder %s127, %s128
      %p140 = scmp.eq.s32.totalorder %s34, 1
      %p141 = por %p139, %p140
      %p143 = scmp.ne.s32.totalorder %s128, %s142
      %p144 = scmp.eq.s32.totalorder %s34, 0
      %p145 = por %p143, %p144
      %s147 = sadd.s32 %s146, 1
      %p150 = scmp.eq.s32.totalorder %s28, 1
      %p151 = scmp.ne.s32.totalorder %s146, %s148
      %p152 = scmp.eq.s32.totalorder %s28, 0
      %p153 = por %p151, %p152
      %p154 = scmp.ne.s32.totalorder %s146, %s148
      %p155 = scmp.eq.s32.totalorder %s33, 1
      %p156 = por %p154, %p155
      %p157 = scmp.ne.s32.totalorder %s148, %s149
      %p158 = scmp.eq.s32.totalorder %s33, 0
      %p159 = por %p157, %p158
      %p160 = scmp.ne.s32.totalorder %s148, %s149
      %p161 = scmp.eq.s32.totalorder %s34, 1
      %p162 = por %p160, %p161
      %p164 = scmp.ne.s32.totalorder %s149, %s163
      %p165 = scmp.eq.s32.totalorder %s34, 0
      %p166 = por %p164, %p165
      %s168 = sadd.s32 %s167, 1
      %p171 = scmp.eq.s32.totalorder %s28, 1
      %p172 = scmp.ne.s32.totalorder %s167, %s169
      %p173 = scmp.eq.s32.totalorder %s28, 0
      %p174 = por %p172, %p173
      %p175 = scmp.ne.s32.totalorder %s167, %s169
      %p176 = scmp.eq.s32.totalorder %s33, 1
      %p177 = por %p175, %p176
      %p178 = scmp.ne.s32.totalorder %s169, %s170
      %p179 = scmp.eq.s32.totalorder %s33, 0
      %p180 = por %p178, %p179
      %p181 = scmp.ne.s32.totalorder %s169, %s170
      %p182 = scmp.eq.s32.totalorder %s34, 1
      %p183 = por %p181, %p182
      %p185 = scmp.ne.s32.totalorder %s170, %s184
      %p186 = scmp.eq.s32.totalorder %s34, 0
      %p187 = por %p185, %p186
      %s189 = sadd.s32 %s188, 1
      %p192 = scmp.eq.s32.totalorder %s28, 1
      %p193 = scmp.ne.s32.totalorder %s188, %s190
      %p194 = scmp.eq.s32.totalorder %s28, 0
      %p195 = por %p193, %p194
      %p196 = scmp.ne.s32.totalorder %s188, %s190
      %p197 = scmp.eq.s32.totalorder %s33, 1
      %p198 = por %p196, %p197
      %p199 = scmp.ne.s32.totalorder %s190, %s191
      %p200 = scmp.eq.s32.totalorder %s33, 0
      %p201 = por %p199, %p200
      %p202 = scmp.ne.s32.totalorder %s190, %s191
      %p203 = scmp.eq.s32.totalorder %s34, 1
      %p204 = por %p202, %p203
      %p206 = scmp.ne.s32.totalorder %s191, %s205
      %p207 = scmp.eq.s32.totalorder %s34, 0
      %p208 = por %p206, %p207
      %s210 = sadd.s32 %s209, 1
      %p213 = scmp.eq.s32.totalorder %s28, 1
      %p214 = scmp.ne.s32.totalorder %s209, %s211
      %p215 = scmp.eq.s32.totalorder %s28, 0
      %p216 = por %p214, %p215
      %p217 = scmp.ne.s32.totalorder %s209, %s211
      %p218 = scmp.eq.s32.totalorder %s33, 1
      %p219 = por %p217, %p218
      %p220 = scmp.ne.s32.totalorder %s211, %s212
      %p221 = scmp.eq.s32.totalorder %s33, 0
      %p222 = por %p220, %p221
      %p223 = scmp.ne.s32.totalorder %s211, %s212
      %p224 = scmp.eq.s32.totalorder %s34, 1
      %p225 = por %p223, %p224
      %p227 = scmp.ne.s32.totalorder %s212, %s226
      %p228 = scmp.eq.s32.totalorder %s34, 0
      %p229 = por %p227, %p228
      %s230 = ssub.s32 %s28, %s35
      %p231 = scmp.eq.s32.totalorder %s230, 0
      %s233 = sadd.s32 %s232, 1
      %s234 = scalar_select %p231, %s232, %s233
      %p237 = pneg %p231
      %p238 = scmp.eq.s32.totalorder %s28, 1
      %p239 = por %p237, %p238
      %p240 = scmp.ne.s32.totalorder %s232, %s235
      %p241 = scmp.eq.s32.totalorder %s28, 0
      %p242 = por %p240, %p241
      %p243 = scmp.ne.s32.totalorder %s232, %s235
      %p244 = scmp.eq.s32.totalorder %s33, 1
      %p245 = por %p243, %p244
      %p246 = scmp.ne.s32.totalorder %s235, %s236
      %p247 = scmp.eq.s32.totalorder %s33, 0
      %p248 = por %p246, %p247
      %p249 = scmp.ne.s32.totalorder %s235, %s236
      %p250 = scmp.eq.s32.totalorder %s34, 1
      %p251 = por %p249, %p250
      %p253 = scmp.ne.s32.totalorder %s236, %s252
      %p254 = scmp.eq.s32.totalorder %s34, 0
      %p255 = por %p253, %p254
      %s256 = ssub.s32 %s28, %s35
      %p257 = scmp.eq.s32.totalorder %s256, 0
      %s259 = sadd.s32 %s258, 1
      %s260 = scalar_select %p257, %s258, %s259
      %p263 = pneg %p257
      %p264 = scmp.eq.s32.totalorder %s28, 1
      %p265 = por %p263, %p264
      %p266 = scmp.ne.s32.totalorder %s258, %s261
      %p267 = scmp.eq.s32.totalorder %s28, 0
      %p268 = por %p266, %p267
      %p269 = scmp.ne.s32.totalorder %s258, %s261
      %p270 = scmp.eq.s32.totalorder %s33, 1
      %p271 = por %p269, %p270
      %p272 = scmp.ne.s32.totalorder %s261, %s262
      %p273 = scmp.eq.s32.totalorder %s33, 0
      %p274 = por %p272, %p273
      %p275 = scmp.ne.s32.totalorder %s261, %s262
      %p276 = scmp.eq.s32.totalorder %s34, 1
      %p277 = por %p275, %p276
      %p279 = scmp.ne.s32.totalorder %s262, %s278
      %p280 = scmp.eq.s32.totalorder %s34, 0
      %p281 = por %p279, %p280
      %p282 = scmp.le.s32.totalorder 1, %s28
      %p283 = scmp.lt.s32.totalorder %s28, 3
      %p284 = pnand %p282, %p283
      %p285 = pneg %p284
      // Predicated region
      $region9: #{tpu_custom_call.1} parent=5 // pred_check
        _
      $region10: #{tpu_custom_call.1} parent=5 // pred_check_branch
        %287 = sbr.rel (%p284) target = $region12
      $region11: #{tpu_custom_call.1} parent=5 // pred_region
        %s288 = ssub.s32 %s28, 1
        // Predicated region
        $region13: #{tpu_custom_call.1} parent=11 // pred_check
          %p289 = pneg %p75
        $region14: #{tpu_custom_call.1} parent=11 // pred_check_branch
          %291 = sbr.rel (%p289) target = $region16
        $region15: #{tpu_custom_call.1} parent=11 // pred_region
          %s293 = ssub.s32 2048, 2048
          %294 = vsyncadd [#allocation6], %s293
          %s295 = sshll.u32 [#allocation5], 4
          %s296 = int_to_ptr.vmem [resolvable:$true] %s295
          %301 = dma.hbm_to_vmem [thread:$0]  %s1, 2048, %s296, [#allocation6], 128, 128, 8
        $region16: #{tpu_custom_call.1} parent=11 // pred_fallthru
          _
        // Predicated region
        $region17: #{tpu_custom_call.1} parent=11 // pred_check
          %p302 = pneg %p96
        $region18: #{tpu_custom_call.1} parent=11 // pred_check_branch
          %304 = sbr.rel (%p302) target = $region20
        $region19: #{tpu_custom_call.1} parent=11 // pred_region
          _
        $region20: #{tpu_custom_call.1} parent=11 // pred_fallthru
          _
        // Predicated region
        $region21: #{tpu_custom_call.1} parent=11 // pred_check
          %p305 = pneg %p117
        $region22: #{tpu_custom_call.1} parent=11 // pred_check_branch
          %307 = sbr.rel (%p305) target = $region24
        $region23: #{tpu_custom_call.1} parent=11 // pred_region
          %s309 = ssub.s32 2048, 2048
          %310 = vsyncadd [#allocation6], %s309
          %s311 = sshll.u32 [#allocation7], 4
          %s312 = int_to_ptr.vmem [resolvable:$true] %s311
          %317 = dma.hbm_to_vmem [thread:$0]  %s3, 2048, %s312, [#allocation6], 128, 128, 8
        $region24: #{tpu_custom_call.1} parent=11 // pred_fallthru
          _
        // Predicated region
        $region25: #{tpu_custom_call.1} parent=11 // pred_check
          %p318 = pneg %p138
        $region26: #{tpu_custom_call.1} parent=11 // pred_check_branch
          %320 = sbr.rel (%p318) target = $region28
        $region27: #{tpu_custom_call.1} parent=11 // pred_region
          _
        $region28: #{tpu_custom_call.1} parent=11 // pred_fallthru
          _
        // Predicated region
        $region29: #{tpu_custom_call.1} parent=11 // pred_check
          %p321 = pneg %p159
        $region30: #{tpu_custom_call.1} parent=11 // pred_check_branch
          %323 = sbr.rel (%p321) target = $region32
        $region31: #{tpu_custom_call.1} parent=11 // pred_region
          %s325 = ssub.s32 2048, 2048
          %326 = vsyncadd [#allocation9], %s325
          %s327 = sshll.u32 [#allocation8], 4
          %s328 = int_to_ptr.vmem [resolvable:$true] %s327
          %333 = dma.hbm_to_vmem [thread:$0]  %s5, 2048, %s328, [#allocation9], 128, 128, 8
        $region32: #{tpu_custom_call.1} parent=11 // pred_fallthru
          _
        // Predicated region
        $region33: #{tpu_custom_call.1} parent=11 // pred_check
          %p334 = pneg %p180
        $region34: #{tpu_custom_call.1} parent=11 // pred_check_branch
          %336 = sbr.rel (%p334) target = $region36
        $region35: #{tpu_custom_call.1} parent=11 // pred_region
          _
        $region36: #{tpu_custom_call.1} parent=11 // pred_fallthru
          _
        // Predicated region
        $region37: #{tpu_custom_call.1} parent=11 // pred_check
          %p337 = pneg %p201
        $region38: #{tpu_custom_call.1} parent=11 // pred_check_branch
          %339 = sbr.rel (%p337) target = $region40
        $region39: #{tpu_custom_call.1} parent=11 // pred_region
          %s341 = ssub.s32 2048, 2048
          %342 = vsyncadd [#allocation9], %s341
          %s343 = sshll.u32 [#allocation10], 4
          %s344 = int_to_ptr.vmem [resolvable:$true] %s343
          %349 = dma.hbm_to_vmem [thread:$0]  %s7, 2048, %s344, [#allocation9], 128, 128, 8
        $region40: #{tpu_custom_call.1} parent=11 // pred_fallthru
          _
        // Predicated region
        $region41: #{tpu_custom_call.1} parent=11 // pred_check
          %p350 = pneg %p222
        $region42: #{tpu_custom_call.1} parent=11 // pred_check_branch
          %352 = sbr.rel (%p350) target = $region44
        $region43: #{tpu_custom_call.1} parent=11 // pred_region
          _
        $region44: #{tpu_custom_call.1} parent=11 // pred_fallthru
          _
      $region12: #{tpu_custom_call.1} parent=5 // pred_fallthru
        _
      %p353 = scmp.lt.s32.totalorder %s28, 2
      // Predicated region
      $region45: #{tpu_custom_call.1} parent=5 // pred_check
        %p354 = pneg %p353
      $region46: #{tpu_custom_call.1} parent=5 // pred_check_branch
        %356 = sbr.rel (%p354) target = $region48
      $region47: #{tpu_custom_call.1} parent=5 // pred_region
        // Predicated region
        $region49: #{tpu_custom_call.1} parent=47 // pred_check
          %p357 = pneg %p48
        $region50: #{tpu_custom_call.1} parent=47 // pred_check_branch
          %359 = sbr.rel (%p357) target = $region52
        $region51: #{tpu_custom_call.1} parent=47 // pred_region
          %s360 = sand.u32 %s38, 1
          %s361 = scalar_lea.sflag [#allocation3], %s360
          %s362 = sand.u32 %s38, 1
          %s363 = smul.addr %s362, 16
          %s364 = scalar_lea.vmem [#allocation2], %s363
          %s365 = smul.u32 2, %s28
          %s367 = ssub.s32 256, 256
          %368 = vsyncadd %s361, %s367
          %s369 = smul.addr %s365, 128
          %s370 = scalar_lea.hbm %s0, %s369
          %s371 = sshll.u32 %s364, 4
          %s372 = int_to_ptr.vmem [resolvable:$true] %s371
          %377 = dma.hbm_to_vmem [thread:$0]  %s370, 256, %s372, %s361, 128, 128, 8
        $region52: #{tpu_custom_call.1} parent=47 // pred_fallthru
          _
      $region48: #{tpu_custom_call.1} parent=5 // pred_fallthru
        _
      %p378 = scmp.le.s32.totalorder 1, %s28
      %p379 = scmp.lt.s32.totalorder %s28, 3
      %p380 = pnand %p378, %p379
      %p381 = pneg %p380
      // Predicated region
      $region53: #{tpu_custom_call.1} parent=5 // pred_check
        _
      $region54: #{tpu_custom_call.1} parent=5 // pred_check_branch
        %383 = sbr.rel (%p380) target = $region56
      $region55: #{tpu_custom_call.1} parent=5 // pred_region
        %s384 = ssub.s32 %s28, 1
        %s385 = sand.u32 %s41, 1
        %s386 = scalar_lea.sflag [#allocation3], %s385
        %s387 = sand.u32 %s41, 1
        %s388 = smul.addr %s387, 16
        %s389 = scalar_lea.vmem [#allocation2], %s388
        // Predicated region
        $region57: #{tpu_custom_call.1} parent=55 // pred_check
          %p390 = pneg %p54
        $region58: #{tpu_custom_call.1} parent=55 // pred_check_branch
          %392 = sbr.rel (%p390) target = $region60
        $region59: #{tpu_custom_call.1} parent=55 // pred_region
          %393 = dma.done %s386, 256
        $region60: #{tpu_custom_call.1} parent=55 // pred_fallthru
          _
        // Predicated region
        $region61: #{tpu_custom_call.1} parent=55 // pred_check
          %p394 = pneg %p75
        $region62: #{tpu_custom_call.1} parent=55 // pred_check_branch
          %396 = sbr.rel (%p394) target = $region64
        $region63: #{tpu_custom_call.1} parent=55 // pred_region
          %397 = dma.done [#allocation6], 2048
        $region64: #{tpu_custom_call.1} parent=55 // pred_fallthru
          _
        // Predicated region
        $region65: #{tpu_custom_call.1} parent=55 // pred_check
          %p398 = pneg %p117
        $region66: #{tpu_custom_call.1} parent=55 // pred_check_branch
          %400 = sbr.rel (%p398) target = $region68
        $region67: #{tpu_custom_call.1} parent=55 // pred_region
          %401 = dma.done [#allocation6], 2048
        $region68: #{tpu_custom_call.1} parent=55 // pred_fallthru
          _
        // Predicated region
        $region69: #{tpu_custom_call.1} parent=55 // pred_check
          %p402 = pneg %p159
        $region70: #{tpu_custom_call.1} parent=55 // pred_check_branch
          %404 = sbr.rel (%p402) target = $region72
        $region71: #{tpu_custom_call.1} parent=55 // pred_region
          %405 = dma.done [#allocation9], 2048
        $region72: #{tpu_custom_call.1} parent=55 // pred_fallthru
          _
        // Predicated region
        $region73: #{tpu_custom_call.1} parent=55 // pred_check
          %p406 = pneg %p201
        $region74: #{tpu_custom_call.1} parent=55 // pred_check_branch
          %408 = sbr.rel (%p406) target = $region76
        $region75: #{tpu_custom_call.1} parent=55 // pred_region
          %409 = dma.done [#allocation9], 2048
        $region76: #{tpu_custom_call.1} parent=55 // pred_fallthru
          _
        %s410 = sand.u32 %s41, 1
        %s411 = scalar_lea.sflag [#allocation3], %s410
        %s412 = sand.u32 %s41, 1
        %s413 = smul.addr %s412, 16
        %s414 = scalar_lea.vmem [#allocation2], %s413
        %p415 = pneg %p54
        %p416 = pneg %p51
        %p417 = pneg %p75
        %p418 = pneg %p72
        %p419 = pneg %p96
        %p420 = pneg %p93
        %p421 = pneg %p117
        %p422 = pneg %p114
        %p423 = pneg %p138
        %p424 = pneg %p135
        %p425 = pneg %p159
        %p426 = pneg %p156
        %p427 = pneg %p180
        %p428 = pneg %p177
        %p429 = pneg %p201
        %p430 = pneg %p198
        %p431 = pneg %p222
        %p432 = pneg %p219
        %p433 = pneg %p248
        %p434 = pneg %p245
        %s435 = sand.u32 %s235, 1
        %s436 = scalar_lea.sflag [#allocation4], %s435
        %s437 = sand.u32 %s235, 1
        %s438 = smul.addr %s437, 16
        %s439 = scalar_lea.vmem [#allocation11], %s438
        %p440 = pneg %p274
        %p441 = pneg %p271
        %s442 = sand.u32 %s261, 1
        %s443 = scalar_lea.sflag [#allocation13], %s442
        %s444 = sand.u32 %s261, 1
        %s445 = smul.addr %s444, 16
        %s446 = scalar_lea.vmem [#allocation12], %s445
        %s447 = smul.u32 2, %s33
        %s448 = smul.u32 2, %s33
        %s449 = smul.u32 2, %s33
        %v450 = vld [vmem:[%s389] sm:$0xff]
        %v451 = vld [vmem:[%s389 + $0x8] sm:$0xff]
        %v452 = vld [vmem:[#allocation5] sm:$0xff]
        %v453 = vld [vmem:[#allocation5 + $0x8] sm:$0xff]
        %v454 = vld [vmem:[#allocation5 + $0x10] sm:$0xff]
        %v455 = vld [vmem:[#allocation5 + $0x18] sm:$0xff]
        %v456 = vld [vmem:[#allocation5 + $0x20] sm:$0xff]
        %v457 = vld [vmem:[#allocation5 + $0x28] sm:$0xff]
        %v458 = vld [vmem:[#allocation5 + $0x30] sm:$0xff]
        %v459 = vld [vmem:[#allocation5 + $0x38] sm:$0xff]
        %v460 = vld [vmem:[#allocation5 + $0x40] sm:$0xff]
        %v461 = vld [vmem:[#allocation5 + $0x48] sm:$0xff]
        %v462 = vld [vmem:[#allocation5 + $0x50] sm:$0xff]
        %v463 = vld [vmem:[#allocation5 + $0x58] sm:$0xff]
        %v464 = vld [vmem:[#allocation5 + $0x60] sm:$0xff]
        %v465 = vld [vmem:[#allocation5 + $0x68] sm:$0xff]
        %v466 = vld [vmem:[#allocation5 + $0x70] sm:$0xff]
        %v467 = vld [vmem:[#allocation5 + $0x78] sm:$0xff]
        %v468 = vld [vmem:[%s2] sm:$0x1]
        %v470 = vlaneseq
        %v471 = vshrl.u32 %v470, 7
        %v472 = vsub.s32 0, %v471
        %v473 = vrot.slane %v468, %v472
        %475 = vmatprep.subr.mxu0 0.0
        %476 = vmatpush1.msra.mxu0 %v452
        %477 = vmatprep.subr.mxu0 0.0
        %478 = vmatpush1.msra.mxu0 %v453
        %479 = vmatprep.subr.mxu0 0.0
        %480 = vmatpush1.msra.mxu0 %v454
        %481 = vmatprep.subr.mxu0 0.0
        %482 = vmatpush1.msra.mxu0 %v455
        %483 = vmatprep.subr.mxu0 0.0
        %484 = vmatpush1.msra.mxu0 %v456
        %485 = vmatprep.subr.mxu0 0.0
        %486 = vmatpush1.msra.mxu0 %v457
        %487 = vmatprep.subr.mxu0 0.0
        %488 = vmatpush1.msra.mxu0 %v458
        %489 = vmatprep.subr.mxu0 0.0
        %490 = vmatpush1.msra.mxu0 %v459
        %491 = vmatprep.subr.mxu0 0.0
        %492 = vmatpush1.msra.mxu0 %v460
        %493 = vmatprep.subr.mxu0 0.0
        %494 = vmatpush1.msra.mxu0 %v461
        %495 = vmatprep.subr.mxu0 0.0
        %496 = vmatpush1.msra.mxu0 %v462
        %497 = vmatprep.subr.mxu0 0.0
        %498 = vmatpush1.msra.mxu0 %v463
        %499 = vmatprep.subr.mxu0 0.0
        %500 = vmatpush1.msra.mxu0 %v464
        %501 = vmatprep.subr.mxu0 0.0
        %502 = vmatpush1.msra.mxu0 %v465
        %503 = vmatprep.subr.mxu0 0.0
        %504 = vmatpush1.msra.mxu0 %v466
        %505 = vmatprep.subr.mxu0 0.0
        %506 = vmatpush1.msra.mxu0 %v467
        %507 = vmatprep.subr.mxu0 0.0
        %508 = vmatpush1.msra.mxu0 0.0
        %509 = vmatprep.subr.mxu0 0.0
        %510 = vmatpush1.msra.mxu0 0.0
        %511 = vmatprep.subr.mxu0 0.0
        %512 = vmatpush1.msra.mxu0 0.0
        %513 = vmatprep.subr.mxu0 0.0
        %514 = vmatpush1.msra.mxu0 0.0
        %515 = vmatprep.subr.mxu0 0.0
        %516 = vmatpush1.msra.mxu0 0.0
        %517 = vmatprep.subr.mxu0 0.0
        %518 = vmatpush1.msra.mxu0 0.0
        %519 = vmatprep.subr.mxu0 0.0
        %520 = vmatpush1.msra.mxu0 0.0
        %521 = vmatprep.subr.mxu0 0.0
        %522 = vmatpush1.msra.mxu0 0.0
        %523 = vmatprep.subr.mxu0 0.0
        %524 = vmatpush1.msra.mxu0 0.0
        %525 = vmatprep.subr.mxu0 0.0
        %526 = vmatpush1.msra.mxu0 0.0
        %527 = vmatprep.subr.mxu0 0.0
        %528 = vmatpush1.msra.mxu0 0.0
        %529 = vmatprep.subr.mxu0 0.0
        %530 = vmatpush1.msra.mxu0 0.0
        %531 = vmatprep.subr.mxu0 0.0
        %532 = vmatpush1.msra.mxu0 0.0
        %533 = vmatprep.subr.mxu0 0.0
        %534 = vmatpush1.msra.mxu0 0.0
        %535 = vmatprep.subr.mxu0 0.0
        %536 = vmatpush1.msra.mxu0 0.0
        %537 = vmatprep.subr.mxu0 0.0
        %538 = vmatpush1.msra.mxu0 0.0
        %539 = vmatprep.mubr.f32.mxu0 0.0
        %540 = vmatmul.mubr.f32.gmra.mrb[0].mxu0 %v450
        %v541 = vpop.f32.mrb[0].mxu0
        %v542 = vadd.f32 %v473, %v541
        %v543 = vpop.f32.mrb[0].mxu0
        %544 = vmatprep.mubr.f32.mxu0 0.0
        %545 = vmatmul.mubr.f32.gmra.mrb[0].mxu0 %v451
        %v546 = vpop.f32.mrb[0].mxu0
        %v547 = vadd.f32 %v473, %v546
        %v548 = vpop.f32.mrb[0].mxu0
        %549 = vdwg.mxu0
        %v550 = vmax.f32 %v542, 0.0
        %v551 = vmax.f32 %v547, 0.0
        %v552 = vld [vmem:[#allocation7] sm:$0xff]
        %v553 = vld [vmem:[#allocation7 + $0x8] sm:$0xff]
        %v554 = vld [vmem:[#allocation7 + $0x10] sm:$0xff]
        %v555 = vld [vmem:[#allocation7 + $0x18] sm:$0xff]
        %v556 = vld [vmem:[#allocation7 + $0x20] sm:$0xff]
        %v557 = vld [vmem:[#allocation7 + $0x28] sm:$0xff]
        %v558 = vld [vmem:[#allocation7 + $0x30] sm:$0xff]
        %v559 = vld [vmem:[#allocation7 + $0x38] sm:$0xff]
        %v560 = vld [vmem:[#allocation7 + $0x40] sm:$0xff]
        %v561 = vld [vmem:[#allocation7 + $0x48] sm:$0xff]
        %v562 = vld [vmem:[#allocation7 + $0x50] sm:$0xff]
        %v563 = vld [vmem:[#allocation7 + $0x58] sm:$0xff]
        %v564 = vld [vmem:[#allocation7 + $0x60] sm:$0xff]
        %v565 = vld [vmem:[#allocation7 + $0x68] sm:$0xff]
        %v566 = vld [vmem:[#allocation7 + $0x70] sm:$0xff]
        %v567 = vld [vmem:[#allocation7 + $0x78] sm:$0xff]
        %v568 = vld [vmem:[%s4] sm:$0x1]
        %v570 = vlaneseq
        %v571 = vshrl.u32 %v570, 7
        %v572 = vsub.s32 0, %v571
        %v573 = vrot.slane %v568, %v572
        %575 = vmatprep.subr.mxu0 0.0
        %576 = vmatpush1.msra.mxu0 %v552
        %577 = vmatprep.subr.mxu0 0.0
        %578 = vmatpush1.msra.mxu0 %v553
        %579 = vmatprep.subr.mxu0 0.0
        %580 = vmatpush1.msra.mxu0 %v554
        %581 = vmatprep.subr.mxu0 0.0
        %582 = vmatpush1.msra.mxu0 %v555
        %583 = vmatprep.subr.mxu0 0.0
        %584 = vmatpush1.msra.mxu0 %v556
        %585 = vmatprep.subr.mxu0 0.0
        %586 = vmatpush1.msra.mxu0 %v557
        %587 = vmatprep.subr.mxu0 0.0
        %588 = vmatpush1.msra.mxu0 %v558
        %589 = vmatprep.subr.mxu0 0.0
        %590 = vmatpush1.msra.mxu0 %v559
        %591 = vmatprep.subr.mxu0 0.0
        %592 = vmatpush1.msra.mxu0 %v560
        %593 = vmatprep.subr.mxu0 0.0
        %594 = vmatpush1.msra.mxu0 %v561
        %595 = vmatprep.subr.mxu0 0.0
        %596 = vmatpush1.msra.mxu0 %v562
        %597 = vmatprep.subr.mxu0 0.0
        %598 = vmatpush1.msra.mxu0 %v563
        %599 = vmatprep.subr.mxu0 0.0
        %600 = vmatpush1.msra.mxu0 %v564
        %601 = vmatprep.subr.mxu0 0.0
        %602 = vmatpush1.msra.mxu0 %v565
        %603 = vmatprep.subr.mxu0 0.0
        %604 = vmatpush1.msra.mxu0 %v566
        %605 = vmatprep.subr.mxu0 0.0
        %606 = vmatpush1.msra.mxu0 %v567
        %607 = vmatprep.subr.mxu0 0.0
        %608 = vmatpush1.msra.mxu0 0.0
        %609 = vmatprep.subr.mxu0 0.0
        %610 = vmatpush1.msra.mxu0 0.0
        %611 = vmatprep.subr.mxu0 0.0
        %612 = vmatpush1.msra.mxu0 0.0
        %613 = vmatprep.subr.mxu0 0.0
        %614 = vmatpush1.msra.mxu0 0.0
        %615 = vmatprep.subr.mxu0 0.0
        %616 = vmatpush1.msra.mxu0 0.0
        %617 = vmatprep.subr.mxu0 0.0
        %618 = vmatpush1.msra.mxu0 0.0
        %619 = vmatprep.subr.mxu0 0.0
        %620 = vmatpush1.msra.mxu0 0.0
        %621 = vmatprep.subr.mxu0 0.0
        %622 = vmatpush1.msra.mxu0 0.0
        %623 = vmatprep.subr.mxu0 0.0
        %624 = vmatpush1.msra.mxu0 0.0
        %625 = vmatprep.subr.mxu0 0.0
        %626 = vmatpush1.msra.mxu0 0.0
        %627 = vmatprep.subr.mxu0 0.0
        %628 = vmatpush1.msra.mxu0 0.0
        %629 = vmatprep.subr.mxu0 0.0
        %630 = vmatpush1.msra.mxu0 0.0
        %631 = vmatprep.subr.mxu0 0.0
        %632 = vmatpush1.msra.mxu0 0.0
        %633 = vmatprep.subr.mxu0 0.0
        %634 = vmatpush1.msra.mxu0 0.0
        %635 = vmatprep.subr.mxu0 0.0
        %636 = vmatpush1.msra.mxu0 0.0
        %637 = vmatprep.subr.mxu0 0.0
        %638 = vmatpush1.msra.mxu0 0.0
        %639 = vmatprep.mubr.f32.mxu0 0.0
        %640 = vmatmul.mubr.f32.gmra.mrb[0].mxu0 %v550
        %v641 = vpop.f32.mrb[0].mxu0
        %v642 = vadd.f32 %v573, %v641
        %v643 = vpop.f32.mrb[0].mxu0
        %644 = vmatprep.mubr.f32.mxu0 0.0
        %645 = vmatmul.mubr.f32.gmra.mrb[0].mxu0 %v551
        %v646 = vpop.f32.mrb[0].mxu0
        %v647 = vadd.f32 %v573, %v646
        %v648 = vpop.f32.mrb[0].mxu0
        %649 = vdwg.mxu0
        %v650 = vmax.f32 %v642, 0.0
        %v651 = vmax.f32 %v647, 0.0
        %652 = vst [vmem:[%s446] sm:$0xff] %v650
        %653 = vst [vmem:[%s446 + $0x8] sm:$0xff] %v651
        %v654 = vld [vmem:[#allocation8] sm:$0xff]
        %v655 = vld [vmem:[#allocation8 + $0x8] sm:$0xff]
        %v656 = vld [vmem:[#allocation8 + $0x10] sm:$0xff]
        %v657 = vld [vmem:[#allocation8 + $0x18] sm:$0xff]
        %v658 = vld [vmem:[#allocation8 + $0x20] sm:$0xff]
        %v659 = vld [vmem:[#allocation8 + $0x28] sm:$0xff]
        %v660 = vld [vmem:[#allocation8 + $0x30] sm:$0xff]
        %v661 = vld [vmem:[#allocation8 + $0x38] sm:$0xff]
        %v662 = vld [vmem:[#allocation8 + $0x40] sm:$0xff]
        %v663 = vld [vmem:[#allocation8 + $0x48] sm:$0xff]
        %v664 = vld [vmem:[#allocation8 + $0x50] sm:$0xff]
        %v665 = vld [vmem:[#allocation8 + $0x58] sm:$0xff]
        %v666 = vld [vmem:[#allocation8 + $0x60] sm:$0xff]
        %v667 = vld [vmem:[#allocation8 + $0x68] sm:$0xff]
        %v668 = vld [vmem:[#allocation8 + $0x70] sm:$0xff]
        %v669 = vld [vmem:[#allocation8 + $0x78] sm:$0xff]
        %v670 = vld [vmem:[%s6] sm:$0x1]
        %v672 = vlaneseq
        %v673 = vshrl.u32 %v672, 7
        %v674 = vsub.s32 0, %v673
        %v675 = vrot.slane %v670, %v674
        %677 = vmatprep.subr.mxu0 0.0
        %678 = vmatpush1.msra.mxu0 %v654
        %679 = vmatprep.subr.mxu0 0.0
        %680 = vmatpush1.msra.mxu0 %v655
        %681 = vmatprep.subr.mxu0 0.0
        %682 = vmatpush1.msra.mxu0 %v656
        %683 = vmatprep.subr.mxu0 0.0
        %684 = vmatpush1.msra.mxu0 %v657
        %685 = vmatprep.subr.mxu0 0.0
        %686 = vmatpush1.msra.mxu0 %v658
        %687 = vmatprep.subr.mxu0 0.0
        %688 = vmatpush1.msra.mxu0 %v659
        %689 = vmatprep.subr.mxu0 0.0
        %690 = vmatpush1.msra.mxu0 %v660
        %691 = vmatprep.subr.mxu0 0.0
        %692 = vmatpush1.msra.mxu0 %v661
        %693 = vmatprep.subr.mxu0 0.0
        %694 = vmatpush1.msra.mxu0 %v662
        %695 = vmatprep.subr.mxu0 0.0
        %696 = vmatpush1.msra.mxu0 %v663
        %697 = vmatprep.subr.mxu0 0.0
        %698 = vmatpush1.msra.mxu0 %v664
        %699 = vmatprep.subr.mxu0 0.0
        %700 = vmatpush1.msra.mxu0 %v665
        %701 = vmatprep.subr.mxu0 0.0
        %702 = vmatpush1.msra.mxu0 %v666
        %703 = vmatprep.subr.mxu0 0.0
        %704 = vmatpush1.msra.mxu0 %v667
        %705 = vmatprep.subr.mxu0 0.0
        %706 = vmatpush1.msra.mxu0 %v668
        %707 = vmatprep.subr.mxu0 0.0
        %708 = vmatpush1.msra.mxu0 %v669
        %709 = vmatprep.subr.mxu0 0.0
        %710 = vmatpush1.msra.mxu0 0.0
        %711 = vmatprep.subr.mxu0 0.0
        %712 = vmatpush1.msra.mxu0 0.0
        %713 = vmatprep.subr.mxu0 0.0
        %714 = vmatpush1.msra.mxu0 0.0
        %715 = vmatprep.subr.mxu0 0.0
        %716 = vmatpush1.msra.mxu0 0.0
        %717 = vmatprep.subr.mxu0 0.0
        %718 = vmatpush1.msra.mxu0 0.0
        %719 = vmatprep.subr.mxu0 0.0
        %720 = vmatpush1.msra.mxu0 0.0
        %721 = vmatprep.subr.mxu0 0.0
        %722 = vmatpush1.msra.mxu0 0.0
        %723 = vmatprep.subr.mxu0 0.0
        %724 = vmatpush1.msra.mxu0 0.0
        %725 = vmatprep.subr.mxu0 0.0
        %726 = vmatpush1.msra.mxu0 0.0
        %727 = vmatprep.subr.mxu0 0.0
        %728 = vmatpush1.msra.mxu0 0.0
        %729 = vmatprep.subr.mxu0 0.0
        %730 = vmatpush1.msra.mxu0 0.0
        %731 = vmatprep.subr.mxu0 0.0
        %732 = vmatpush1.msra.mxu0 0.0
        %733 = vmatprep.subr.mxu0 0.0
        %734 = vmatpush1.msra.mxu0 0.0
        %735 = vmatprep.subr.mxu0 0.0
        %736 = vmatpush1.msra.mxu0 0.0
        %737 = vmatprep.subr.mxu0 0.0
        %738 = vmatpush1.msra.mxu0 0.0
        %739 = vmatprep.subr.mxu0 0.0
        %740 = vmatpush1.msra.mxu0 0.0
        %741 = vmatprep.mubr.f32.mxu0 0.0
        %742 = vmatmul.mubr.f32.gmra.mrb[0].mxu0 %v650
        %v743 = vpop.f32.mrb[0].mxu0
        %v744 = vadd.f32 %v675, %v743
        %v745 = vpop.f32.mrb[0].mxu0
        %746 = vmatprep.mubr.f32.mxu0 0.0
        %747 = vmatmul.mubr.f32.gmra.mrb[0].mxu0 %v651
        %v748 = vpop.f32.mrb[0].mxu0
        %v749 = vadd.f32 %v675, %v748
        %v750 = vpop.f32.mrb[0].mxu0
        %751 = vdwg.mxu0
        %v752 = vmax.f32 %v744, 0.0
        %v753 = vmax.f32 %v749, 0.0
        %v754 = vld [vmem:[#allocation10] sm:$0xff]
        %v755 = vld [vmem:[#allocation10 + $0x8] sm:$0xff]
        %v756 = vld [vmem:[#allocation10 + $0x10] sm:$0xff]
        %v757 = vld [vmem:[#allocation10 + $0x18] sm:$0xff]
        %v758 = vld [vmem:[#allocation10 + $0x20] sm:$0xff]
        %v759 = vld [vmem:[#allocation10 + $0x28] sm:$0xff]
        %v760 = vld [vmem:[#allocation10 + $0x30] sm:$0xff]
        %v761 = vld [vmem:[#allocation10 + $0x38] sm:$0xff]
        %v762 = vld [vmem:[#allocation10 + $0x40] sm:$0xff]
        %v763 = vld [vmem:[#allocation10 + $0x48] sm:$0xff]
        %v764 = vld [vmem:[#allocation10 + $0x50] sm:$0xff]
        %v765 = vld [vmem:[#allocation10 + $0x58] sm:$0xff]
        %v766 = vld [vmem:[#allocation10 + $0x60] sm:$0xff]
        %v767 = vld [vmem:[#allocation10 + $0x68] sm:$0xff]
        %v768 = vld [vmem:[#allocation10 + $0x70] sm:$0xff]
        %v769 = vld [vmem:[#allocation10 + $0x78] sm:$0xff]
        %v770 = vld [vmem:[%s8] sm:$0x1]
        %v772 = vlaneseq
        %v773 = vshrl.u32 %v772, 7
        %v774 = vsub.s32 0, %v773
        %v775 = vrot.slane %v770, %v774
        %777 = vmatprep.subr.mxu0 0.0
        %778 = vmatpush1.msra.mxu0 %v754
        %779 = vmatprep.subr.mxu0 0.0
        %780 = vmatpush1.msra.mxu0 %v755
        %781 = vmatprep.subr.mxu0 0.0
        %782 = vmatpush1.msra.mxu0 %v756
        %783 = vmatprep.subr.mxu0 0.0
        %784 = vmatpush1.msra.mxu0 %v757
        %785 = vmatprep.subr.mxu0 0.0
        %786 = vmatpush1.msra.mxu0 %v758
        %787 = vmatprep.subr.mxu0 0.0
        %788 = vmatpush1.msra.mxu0 %v759
        %789 = vmatprep.subr.mxu0 0.0
        %790 = vmatpush1.msra.mxu0 %v760
        %791 = vmatprep.subr.mxu0 0.0
        %792 = vmatpush1.msra.mxu0 %v761
        %793 = vmatprep.subr.mxu0 0.0
        %794 = vmatpush1.msra.mxu0 %v762
        %795 = vmatprep.subr.mxu0 0.0
        %796 = vmatpush1.msra.mxu0 %v763
        %797 = vmatprep.subr.mxu0 0.0
        %798 = vmatpush1.msra.mxu0 %v764
        %799 = vmatprep.subr.mxu0 0.0
        %800 = vmatpush1.msra.mxu0 %v765
        %801 = vmatprep.subr.mxu0 0.0
        %802 = vmatpush1.msra.mxu0 %v766
        %803 = vmatprep.subr.mxu0 0.0
        %804 = vmatpush1.msra.mxu0 %v767
        %805 = vmatprep.subr.mxu0 0.0
        %806 = vmatpush1.msra.mxu0 %v768
        %807 = vmatprep.subr.mxu0 0.0
        %808 = vmatpush1.msra.mxu0 %v769
        %809 = vmatprep.subr.mxu0 0.0
        %810 = vmatpush1.msra.mxu0 0.0
        %811 = vmatprep.subr.mxu0 0.0
        %812 = vmatpush1.msra.mxu0 0.0
        %813 = vmatprep.subr.mxu0 0.0
        %814 = vmatpush1.msra.mxu0 0.0
        %815 = vmatprep.subr.mxu0 0.0
        %816 = vmatpush1.msra.mxu0 0.0
        %817 = vmatprep.subr.mxu0 0.0
        %818 = vmatpush1.msra.mxu0 0.0
        %819 = vmatprep.subr.mxu0 0.0
        %820 = vmatpush1.msra.mxu0 0.0
        %821 = vmatprep.subr.mxu0 0.0
        %822 = vmatpush1.msra.mxu0 0.0
        %823 = vmatprep.subr.mxu0 0.0
        %824 = vmatpush1.msra.mxu0 0.0
        %825 = vmatprep.subr.mxu0 0.0
        %826 = vmatpush1.msra.mxu0 0.0
        %827 = vmatprep.subr.mxu0 0.0
        %828 = vmatpush1.msra.mxu0 0.0
        %829 = vmatprep.subr.mxu0 0.0
        %830 = vmatpush1.msra.mxu0 0.0
        %831 = vmatprep.subr.mxu0 0.0
        %832 = vmatpush1.msra.mxu0 0.0
        %833 = vmatprep.subr.mxu0 0.0
        %834 = vmatpush1.msra.mxu0 0.0
        %835 = vmatprep.subr.mxu0 0.0
        %836 = vmatpush1.msra.mxu0 0.0
        %837 = vmatprep.subr.mxu0 0.0
        %838 = vmatpush1.msra.mxu0 0.0
        %839 = vmatprep.subr.mxu0 0.0
        %840 = vmatpush1.msra.mxu0 0.0
        %841 = vmatprep.mubr.f32.mxu0 0.0
        %842 = vmatmul.mubr.f32.gmra.mrb[0].mxu0 %v752
        %v843 = vpop.f32.mrb[0].mxu0
        %v844 = vadd.f32 %v775, %v843
        %v845 = vpop.f32.mrb[0].mxu0
        %846 = vmatprep.mubr.f32.mxu0 0.0
        %847 = vmatmul.mubr.f32.gmra.mrb[0].mxu0 %v753
        %v848 = vpop.f32.mrb[0].mxu0
        %v849 = vadd.f32 %v775, %v848
        %v850 = vpop.f32.mrb[0].mxu0
        %851 = vdwg.mxu0
        %v852 = vxor.u32 %v844, 2147483648
        %v853 = vxor.u32 %v849, 2147483648
        %v854 = vmul.f32 %v852, 1.442695
        %v855 = vpow.pop %v854
        %v856 = vmul.f32 %v853, 1.442695
        %v857 = vpow.pop %v856
        %v858 = vadd.f32 %v855, 1.0
        %v859 = vadd.f32 %v857, 1.0
        %v860 = vrcp.pop %v858
        %v861 = vmul.f32 1.0, %v860
        %v862 = vrcp.pop %v859
        %v863 = vmul.f32 1.0, %v862
        %864 = vst [vmem:[%s439] sm:$0xff] %v861
        %865 = vst [vmem:[%s439 + $0x8] sm:$0xff] %v863
        %s866 = sand.u32 %s235, 1
        %s867 = scalar_lea.sflag [#allocation4], %s866
        %s868 = sand.u32 %s235, 1
        %s869 = smul.addr %s868, 16
        %s870 = scalar_lea.vmem [#allocation11], %s869
        %s871 = sand.u32 %s261, 1
        %s872 = scalar_lea.sflag [#allocation13], %s871
        %s873 = sand.u32 %s261, 1
        %s874 = smul.addr %s873, 16
        %s875 = scalar_lea.vmem [#allocation12], %s874
        // Predicated region
        $region77: #{tpu_custom_call.1} parent=55 // pred_check
          %p876 = pneg %p245
        $region78: #{tpu_custom_call.1} parent=55 // pred_check_branch
          %878 = sbr.rel (%p876) target = $region80
        $region79: #{tpu_custom_call.1} parent=55 // pred_region
          %s879 = smul.u32 2, %s33
          %s881 = ssub.s32 256, 256
          %882 = vsyncadd %s867, %s881
          %s883 = smul.addr %s879, 128
          %s884 = scalar_lea.hbm %s9, %s883
          %s885 = sshll.u32 %s870, 4
          %s886 = int_to_ptr.vmem [resolvable:$true] %s885
          %891 = dma.vmem_to_hbm [thread:$0]  %s886, 256, %s884, %s867, 128, 128, 8
        $region80: #{tpu_custom_call.1} parent=55 // pred_fallthru
          _
        // Predicated region
        $region81: #{tpu_custom_call.1} parent=55 // pred_check
          %p892 = pneg %p271
        $region82: #{tpu_custom_call.1} parent=55 // pred_check_branch
          %894 = sbr.rel (%p892) target = $region84
        $region83: #{tpu_custom_call.1} parent=55 // pred_region
          %s895 = smul.u32 2, %s33
          %s897 = ssub.s32 256, 256
          %898 = vsyncadd %s872, %s897
          %s899 = smul.addr %s895, 128
          %s900 = scalar_lea.hbm %s10, %s899
          %s901 = sshll.u32 %s875, 4
          %s902 = int_to_ptr.vmem [resolvable:$true] %s901
          %907 = dma.vmem_to_hbm [thread:$0]  %s902, 256, %s900, %s872, 128, 128, 8
        $region84: #{tpu_custom_call.1} parent=55 // pred_fallthru
          _
      $region56: #{tpu_custom_call.1} parent=5 // pred_fallthru
        _
      %p908 = scmp.le.s32.totalorder 2, %s28
      // Predicated region
      $region85: #{tpu_custom_call.1} parent=5 // pred_check
        %p909 = pneg %p908
      $region86: #{tpu_custom_call.1} parent=5 // pred_check_branch
        %911 = sbr.rel (%p909) target = $region88
      $region87: #{tpu_custom_call.1} parent=5 // pred_region
        %s912 = ssub.s32 %s28, 2
        // Predicated region
        $region89: #{tpu_custom_call.1} parent=87 // pred_check
          %p913 = pneg %p251
        $region90: #{tpu_custom_call.1} parent=87 // pred_check_branch
          %915 = sbr.rel (%p913) target = $region92
        $region91: #{tpu_custom_call.1} parent=87 // pred_region
          %s916 = sand.u32 %s236, 1
          %s917 = scalar_lea.sflag [#allocation4], %s916
          %s918 = sand.u32 %s236, 1
          %s919 = smul.addr %s918, 16
          %s920 = scalar_lea.vmem [#allocation11], %s919
          %921 = dma.done %s917, 256
        $region92: #{tpu_custom_call.1} parent=87 // pred_fallthru
          _
        // Predicated region
        $region93: #{tpu_custom_call.1} parent=87 // pred_check
          %p922 = pneg %p277
        $region94: #{tpu_custom_call.1} parent=87 // pred_check_branch
          %924 = sbr.rel (%p922) target = $region96
        $region95: #{tpu_custom_call.1} parent=87 // pred_region
          %s925 = sand.u32 %s262, 1
          %s926 = scalar_lea.sflag [#allocation13], %s925
          %s927 = sand.u32 %s262, 1
          %s928 = smul.addr %s927, 16
          %s929 = scalar_lea.vmem [#allocation12], %s928
          %930 = dma.done %s926, 256
        $region96: #{tpu_custom_call.1} parent=87 // pred_fallthru
          _
      $region88: #{tpu_custom_call.1} parent=5 // pred_fallthru
        _
    $region6: #{tpu_custom_call.1} parent=1 // loop_footer
      %s32 = sadd.s32 1, %s28
    $region7: #{tpu_custom_call.1} parent=1 // loop_footer_branch
      %27 = sbr.rel target = $region3
    $region8: #{tpu_custom_call.1} parent=1 // loop_exit
      _
    %931 = vsyncpa [#allocation3], 1
    %s932 = scalar_lea.sflag [#allocation3], 1
    %933 = vsyncpa %s932, 1
    %934 = vsyncpa [#allocation6], 1
    %935 = vsyncpa [#allocation9], 1
    %936 = vsyncpa [#allocation4], 1
    %s937 = scalar_lea.sflag [#allocation4], 1
    %938 = vsyncpa %s937, 1
    %939 = vsyncpa [#allocation13], 1
    %s940 = scalar_lea.sflag [#allocation13], 1
    %941 = vsyncpa %s940, 1

</llo_original>
